<compile_context>
chip_gen: v5e
topology: v5e:2x2
jax: 0.10.0
libtpu: 0.0.40
codegen_flags: <defaults>
</compile_context>

<pallas_src>
from functools import partial

import jax
import jax.numpy as jnp
from jax import lax
from jax.experimental import pallas as pl
from jax.experimental.pallas import tpu as pltpu


def _make_stats_kernel(chunk):
    """Per-block partial BN statistics from x only: Gram = X X^T and colsum(X)."""

    def kernel(xt_ref, stat_ref):
        cin = xt_ref.shape[0]
        nchunks = xt_ref.shape[1] // chunk

        def body(c, carry):
            g, s = carry
            i = pl.multiple_of(c * chunk, chunk)
            xc = xt_ref[:, pl.ds(i, chunk)]                     # (Cin_p, chunk)
            # NT matmul (q @ k.T style): contracts the chunk axis, tiny (Cin_p, Cin_p) out.
            g = g + lax.dot_general(xc, xc, (((1,), (1,)), ((), ())),
                                    preferred_element_type=jnp.float32)
            s = s + jnp.sum(xc, axis=1, keepdims=True)
            return g, s

        g0 = jnp.zeros((cin, cin), jnp.float32)
        s0 = jnp.zeros((cin, 1), jnp.float32)
        g, s = lax.fori_loop(0, nchunks, body, (g0, s0), unroll=True)
        stat_ref[0, :, :cin] = g
        stat_ref[0, :, cin:cin + 1] = s

    return kernel


def _make_fused_kernel(chunk):
    """deconv (matmul with BN scale pre-folded into W) + shift + PReLU, written once."""

    def kernel(xt_ref, w_ref, p_ref, o_ref):
        w = w_ref[...]            # (K8, Cin_p), BN scale folded in
        sh = p_ref[:, 0:1]        # (K8, 1): bias*scale + beta - mean*scale
        al = p_ref[:, 1:2]        # (K8, 1): PReLU slope
        nchunks = xt_ref.shape[1] // chunk

        def body(c, carry):
            i = pl.multiple_of(c * chunk, chunk)
            y = jnp.dot(w, xt_ref[:, pl.ds(i, chunk)],
                        preferred_element_type=jnp.float32) + sh
            o_ref[:, pl.ds(i, chunk)] = jnp.where(y >= 0.0, y, al * y).astype(o_ref.dtype)
            return carry

        lax.fori_loop(0, nchunks, body, 0, unroll=True)

    return kernel


def _pick_tiling(M, K8, Cin_p, out_bytes, tm):
    # Inner chunk: multiple of 128 (lane-dense, aligned stores), sized so the live
    # (K8, chunk) fp32 temporary stays around <= 32 vregs.
    chunk = max(128, min(256, (32768 // K8) // 128 * 128))
    if tm is not None:
        if tm % 128:
            raise ValueError("tm must be a multiple of 128")
        chunk = min(chunk, tm)
        if tm % chunk:
            chunk = 128
    else:
        # Double-buffered per-column VMEM bytes (xt block sublane-padded to Cin_p).
        per_col = 2 * (Cin_p * 4 + K8 * out_bytes)
        budget = 20 << 20
        tm_max = max(chunk, min(8 * chunk, budget // per_col // chunk * chunk))
        m_chunks = -(-M // chunk)
        # Give the grid >= 2 blocks whenever possible so both v7x TensorCores get work.
        blk_cap = min(tm_max // chunk, max(1, -(-m_chunks // 2)))
        blk = blk_cap
        if M % chunk == 0:
            # Prefer a tile that divides M exactly (Mp == M: no row padding and the
            # epilogue slice disappears), but don't shrink the tile below half the cap.
            d = blk_cap
            while d > max(1, blk_cap // 2) and m_chunks % d:
                d -= 1
            if m_chunks % d == 0:
                blk = d
        tm = blk * chunk
    Mp = -(-M // tm) * tm
    return chunk, tm, Mp


def _vmem_limit_bytes(tm, K8, Cin_p, out_bytes):
    # Explicit scoped-VMEM limit sized to the real double-buffered footprint (v5e's
    # default is only 16 MiB) while staying well under v7x's 64 MiB physical VMEM.
    buf = 2 * tm * Cin_p * 4          # xt blocks
    buf += 2 * tm * K8 * out_bytes    # output blocks
    buf += 4 * K8 * 128 * 4           # w_fT + params (lane-padded to 128)
    return int(min(max(buf + (8 << 20), 32 << 20), 48 << 20))


@partial(jax.jit, static_argnames=("eps", "tm", "channels_last", "out_dtype"))
def up_conv_forward(x, weight, bias, gamma, beta, alpha, eps=1e-5, tm=None,
                    channels_last=False, out_dtype=jnp.float32):
    """x: (N, C_in, D, H, W); weight: (C_in, C_out, 2, 2, 2).

    Returns (N, C_out, 2D, 2H, 2W) (or channels-last when channels_last=True).
    """
    N, Cin, D, H, W = x.shape
    Cout = weight.shape[1]
    M = N * D * H * W

    # Pad Cout so 8*Cout is a multiple of 128 (lane-dense output rows) and Cin to a
    # sublane multiple.  Padded weight/bias columns are zero, and after folding the BN
    # scale their outputs are exactly 0 (safe even for bf16 output).
    Cp = Cout if Cout % 16 == 0 else (Cout + 15) // 16 * 16
    Cin_p = max(8, (Cin + 7) // 8 * 8)
    K8 = 8 * Cp

    out_bytes = jnp.dtype(out_dtype).itemsize
    chunk, tm, Mp = _pick_tiling(M, K8, Cin_p, out_bytes, tm)
    grid = (Mp // tm,)
    cparams = pltpu.CompilerParams(
        dimension_semantics=("parallel",),
        vmem_limit_bytes=_vmem_limit_bytes(tm, K8, Cin_p, out_bytes))

    # Channels-first flattened input (Cin_p, Mp).  For N == 1 this is a free reshape;
    # for N > 1 it moves whole contiguous (D*H*W)-sized slabs (cheap vs. the output).
    # TODO(synk): a 2-D (batch, block) grid could avoid even that slab transpose.
    x3 = x.reshape(N, Cin, D * H * W)
    xt = x3[0] if N == 1 else jnp.transpose(x3, (1, 0, 2)).reshape(Cin, M)
    if Cin_p != Cin or Mp != M:
        xt = jnp.pad(xt, ((0, Cin_p - Cin), (0, Mp - M)))

    # (C_in, C_out, kd, kh, kw) -> (Cin_p, kd, kh, kw, Cp) -> (Cin_p, K8)
    w_p = jnp.pad(weight, ((0, Cin_p - Cin), (0, Cp - Cout), (0, 0), (0, 0), (0, 0)))
    w_mat = jnp.transpose(w_p, (0, 2, 3, 4, 1)).reshape(Cin_p, K8)
    b_p = jnp.pad(bias, (0, Cp - Cout))
    g_p = jnp.pad(gamma, (0, Cp - Cout), constant_values=1.0)
    be_p = jnp.pad(beta, (0, Cp - Cout))
    a_p = jnp.pad(alpha, (0, Cp - Cout))

    # ---- Pass 1: per-block colsum(x) and Gram = X X^T (fully parallel grid). ----
    stats = pl.pallas_call(
        _make_stats_kernel(chunk),
        out_shape=jax.ShapeDtypeStruct((grid[0], Cin_p, Cin_p + 1), jnp.float32),
        grid_spec=pltpu.PrefetchScalarGridSpec(
            num_scalar_prefetch=0,
            grid=grid,
            in_specs=[pl.BlockSpec((Cin_p, tm), lambda i: (0, i))],
            out_specs=pl.BlockSpec((1, Cin_p, Cin_p + 1), lambda i: (i, 0, 0)),
        ),
        compiler_params=cparams,
    )(xt)

    # ---- Finalize BN statistics in JAX (all on tiny Cin/K8-sized arrays). ----
    # z := x @ W (bias excluded, which sidesteps most of the E[z^2]-E[z]^2 cancellation);
    # padded rows/columns of xt are zero, so no padding correction is needed.
    tot = jnp.sum(stats, axis=0)                    # (Cin_p, Cin_p + 1)
    G = tot[:, :Cin_p]
    colsum = tot[:, Cin_p]
    sz = colsum @ w_mat                             # (K8,) per-column sum of z
    qz = jnp.sum(w_mat * (G @ w_mat), axis=0)       # (K8,) per-column sum of z^2
    count = jnp.float32(8 * M)                      # elements per output channel
    sz_c = sz.reshape(8, Cp).sum(axis=0)
    qz_c = qz.reshape(8, Cp).sum(axis=0)
    mean_z = sz_c / count
    var = jnp.maximum(qz_c / count - mean_z * mean_z, 0.0)   # biased variance
    mean = mean_z + b_p
    scale_c = g_p / jnp.sqrt(var + eps)
    shift_c = be_p - mean * scale_c

    # Fold BN scale into the weight and conv bias + BN shift into a single shift.
    scale_row = jnp.tile(scale_c, 8)                # (K8,)
    shift_row = jnp.tile(b_p * scale_c + shift_c, 8)
    alpha_row = jnp.tile(a_p, 8)
    w_fT = (w_mat * scale_row[None, :]).T           # (K8, Cin_p)
    params = jnp.stack([shift_row, alpha_row], axis=1)   # (K8, 2)

    # ---- Pass 2: matmul + shift + PReLU; the big tensor touches HBM exactly once. ----
    z = pl.pallas_call(
        _make_fused_kernel(chunk),
        out_shape=jax.ShapeDtypeStruct((K8, Mp), out_dtype),
        grid_spec=pltpu.PrefetchScalarGridSpec(
            num_scalar_prefetch=0,
            grid=grid,
            in_specs=[
                pl.BlockSpec((Cin_p, tm), lambda i: (0, i)),
                pl.BlockSpec((K8, Cin_p), lambda i: (0, 0)),
                pl.BlockSpec((K8, 2), lambda i: (0, 0)),
            ],
            out_specs=pl.BlockSpec((K8, tm), lambda i: (0, i)),
        ),
        compiler_params=cparams,
    )(xt, w_fT, params)

    # ---- Epilogue: a single 2x2x2-interleave transpose straight to the output layout. ----
    if Mp != M:
        z = z[:, :M]
    z = z.reshape(2, 2, 2, Cp, N, D, H, W)          # (kd, kh, kw, c, n, d, h, w)
    if channels_last:
        out = jnp.transpose(z, (4, 5, 0, 6, 1, 7, 2, 3)).reshape(N, 2 * D, 2 * H, 2 * W, Cp)
        return out if Cp == Cout else out[..., :Cout]
    out = jnp.transpose(z, (4, 3, 5, 0, 6, 1, 7, 2)).reshape(N, Cp, 2 * D, 2 * H, 2 * W)
    return out if Cp == Cout else out[:, :Cout]


def reference_forward(x, weight, bias, gamma, beta, alpha, eps=1e-5):
    # Pure-JAX reference of the same PyTorch semantics (for sanity checking).
    N, Cin, D, H, W = x.shape
    Cout = weight.shape[1]
    d = jnp.einsum('ncdhw,coijk->nodhwijk', x, weight)
    d = jnp.transpose(d, (0, 1, 2, 5, 3, 6, 4, 7)).reshape(N, Cout, 2 * D, 2 * H, 2 * W)
    d = d + bias[None, :, None, None, None]
    mean = d.mean(axis=(0, 2, 3, 4), keepdims=True)
    var = d.var(axis=(0, 2, 3, 4), keepdims=True)   # biased, as BN uses for normalization
    bn = (d - mean) / jnp.sqrt(var + eps)
    bn = bn * gamma[None, :, None, None, None] + beta[None, :, None, None, None]
    return jnp.where(bn >= 0, bn, alpha[None, :, None, None, None] * bn)


if __name__ == "__main__":
    key = jax.random.PRNGKey(0)

    configs = [
        # (N, Cin, Cout, D, H, W, tm, channels_last, out_dtype, tol)
        (2, 8, 16, 8, 8, 8, None, False, jnp.float32, 2e-4),   # Mp==M, >=2 grid blocks
        (2, 8, 16, 8, 8, 8, 256, False, jnp.float32, 2e-4),    # 4 blocks -> partial stats
        (1, 4, 12, 6, 6, 6, None, False, jnp.float32, 2e-4),   # Cin/Cout/row padding paths
        (2, 8, 16, 8, 8, 8, None, True, jnp.bfloat16, 6e-2),   # bf16 out + channels-last
    ]

    for (N, Cin, Cout, D, H, W, tm, cl, dt, tol) in configs:
        key, k_x, k_w, k_b, k_g, k_be, k_a = jax.random.split(key, 7)
        x = jax.random.normal(k_x, (N, Cin, D, H, W), jnp.float32)
        weight = 0.1 * jax.random.normal(k_w, (Cin, Cout, 2, 2, 2), jnp.float32)
        bias = 0.1 * jax.random.normal(k_b, (Cout,), jnp.float32)
        gamma = 1.0 + 0.1 * jax.random.normal(k_g, (Cout,), jnp.float32)
        beta = 0.1 * jax.random.normal(k_be, (Cout,), jnp.float32)
        alpha = 0.25 + 0.05 * jax.random.normal(k_a, (Cout,), jnp.float32)

        out = up_conv_forward(x, weight, bias, gamma, beta, alpha, tm=tm,
                              channels_last=cl, out_dtype=dt)
        out = jax.block_until_ready(out)
        if cl:
            assert out.shape == (N, 2 * D, 2 * H, 2 * W, Cout)
        else:
            assert out.shape == (N, Cout, 2 * D, 2 * H, 2 * W)
        assert out.dtype == jnp.dtype(dt)

        ref = reference_forward(x, weight, bias, gamma, beta, alpha)
        if cl:
            ref = jnp.transpose(ref, (0, 2, 3, 4, 1))
        out_f32 = out.astype(jnp.float32)
        err = float(jnp.max(jnp.abs(out_f32 - ref)))
        assert jnp.allclose(out_f32, ref, atol=tol, rtol=tol), (err, out.shape)

    print("KERNEL_OK")
</pallas_src>

<mosaic_0001>
module attributes {stable_mosaic.version = 11 : i64} {
  func.func @kernel(%arg0: i32, %arg1: memref<8x512xf32, #tpu.memory_space<vmem>>, %arg2: memref<1x8x9xf32, #tpu.memory_space<vmem>>) attributes {dimension_semantics = [#tpu.dimension_semantics<parallel>], iteration_bounds = array<i64: 2>, scalar_prefetch = 0 : i64, scratch_operands = 0 : i64, tpu.core_type = #tpu.core_type<tc>, window_params = [{transform_indices = @transform_0, window_bounds = array<i64: 8, 512>}, {transform_indices = @transform_1, window_bounds = array<i64: 1, 8, 9>}]} {
    %cst = arith.constant 0.000000e+00 : f32
    %0 = vector.broadcast %cst : f32 to vector<8x8xf32>
    %cst_0 = arith.constant 0.000000e+00 : f32
    %1 = vector.broadcast %cst_0 : f32 to vector<8x1xf32>
    %c0_i32 = arith.constant 0 : i32
    %c256_i32 = arith.constant 256 : i32
    %2 = arith.muli %c0_i32, %c256_i32 : i32
    %3 = tpu.assume_multiple %2, 256 : i32
    %c0 = arith.constant 0 : index
    %4 = arith.index_cast %3 : i32 to index
    %5 = vector.load %arg1[%c0, %4] : memref<8x512xf32, #tpu.memory_space<vmem>>, vector<8x256xf32>
    %cst_1 = arith.constant dense<0.000000e+00> : vector<8x8xf32>
    %6 = tpu.matmul %5, %5, %cst_1 {dimension_numbers = #tpu.dot_dimension_numbers<[1], [1], [0], [0], [0, 0, 1, 0], [], []>} : vector<8x256xf32>, vector<8x256xf32>, vector<8x8xf32> -> vector<8x8xf32>
    %7 = arith.addf %0, %6 : vector<8x8xf32>
    %cst_2 = arith.constant dense<0.000000e+00> : vector<8xf32>
    %8 = vector.multi_reduction <add>, %5, %cst_2 [1] : vector<8x256xf32> to vector<8xf32>
    %9 = vector.shape_cast %8 : vector<8xf32> to vector<8x1xf32>
    %10 = arith.addf %1, %9 : vector<8x1xf32>
    %c1_i32 = arith.constant 1 : i32
    %c256_i32_3 = arith.constant 256 : i32
    %11 = arith.muli %c1_i32, %c256_i32_3 : i32
    %12 = tpu.assume_multiple %11, 256 : i32
    %c0_4 = arith.constant 0 : index
    %13 = arith.index_cast %12 : i32 to index
    %14 = vector.load %arg1[%c0_4, %13] : memref<8x512xf32, #tpu.memory_space<vmem>>, vector<8x256xf32>
    %cst_5 = arith.constant dense<0.000000e+00> : vector<8x8xf32>
    %15 = tpu.matmul %14, %14, %cst_5 {dimension_numbers = #tpu.dot_dimension_numbers<[1], [1], [0], [0], [0, 0, 1, 0], [], []>} : vector<8x256xf32>, vector<8x256xf32>, vector<8x8xf32> -> vector<8x8xf32>
    %16 = arith.addf %7, %15 : vector<8x8xf32>
    %cst_6 = arith.constant dense<0.000000e+00> : vector<8xf32>
    %17 = vector.multi_reduction <add>, %14, %cst_6 [1] : vector<8x256xf32> to vector<8xf32>
    %18 = vector.shape_cast %17 : vector<8xf32> to vector<8x1xf32>
    %19 = arith.addf %10, %18 : vector<8x1xf32>
    %c2_i32 = arith.constant 2 : i32
    %c0_7 = arith.constant 0 : index
    %c0_8 = arith.constant 0 : index
    %c0_9 = arith.constant 0 : index
    %20 = vector.load %arg2[%c0_7, %c0_8, %c0_9] : memref<1x8x9xf32, #tpu.memory_space<vmem>>, vector<1x8x8xf32>
    %21 = vector.shape_cast %20 : vector<1x8x8xf32> to vector<8x8xf32>
    %22 = vector.shape_cast %16 : vector<8x8xf32> to vector<1x8x8xf32>
    tpu.vector_store %arg2[%c0_7, %c0_8, %c0_9], %22 {strides = array<i32>} : memref<1x8x9xf32, #tpu.memory_space<vmem>>, vector<1x8x8xf32>,
    %c0_10 = arith.constant 0 : index
    %c0_11 = arith.constant 0 : index
    %c8 = arith.constant 8 : index
    %23 = vector.load %arg2[%c0_10, %c0_11, %c8] : memref<1x8x9xf32, #tpu.memory_space<vmem>>, vector<1x8x1xf32>
    %24 = vector.shape_cast %23 : vector<1x8x1xf32> to vector<8x1xf32>
    %25 = vector.shape_cast %19 : vector<8x1xf32> to vector<1x8x1xf32>
    tpu.vector_store %arg2[%c0_10, %c0_11, %c8], %25 {strides = array<i32>} : memref<1x8x9xf32, #tpu.memory_space<vmem>>, vector<1x8x1xf32>,
    return
  }
  func.func @transform_0(%arg0: i32) -> (i32, i32) {
    %c0_i32 = arith.constant 0 : i32
    %c0_i32_0 = arith.constant 0 : i32
    return %c0_i32, %arg0 : i32, i32
  }
  func.func @transform_1(%arg0: i32) -> (i32, i32, i32) {
    %c0_i32 = arith.constant 0 : i32
    %c0_i32_0 = arith.constant 0 : i32
    %c0_i32_1 = arith.constant 0 : i32
    return %arg0, %c0_i32, %c0_i32_0 : i32, i32, i32
  }
}

module attributes {stable_mosaic.version = 11 : i64} {
  func.func @kernel(%arg0: i32, %arg1: memref<8x512xf32, #tpu.memory_space<vmem>>, %arg2: memref<128x8xf32, #tpu.memory_space<vmem>>, %arg3: memref<128x2xf32, #tpu.memory_space<vmem>>, %arg4: memref<128x512xf32, #tpu.memory_space<vmem>>) attributes {dimension_semantics = [#tpu.dimension_semantics<parallel>], iteration_bounds = array<i64: 2>, scalar_prefetch = 0 : i64, scratch_operands = 0 : i64, tpu.core_type = #tpu.core_type<tc>, window_params = [{transform_indices = @transform_0, window_bounds = array<i64: 8, 512>}, {pipeline_mode = #tpu.pipeline_mode<synchronous>, transform_indices = @transform_1, window_bounds = array<i64: 128, 8>}, {pipeline_mode = #tpu.pipeline_mode<synchronous>, transform_indices = @transform_2, window_bounds = array<i64: 128, 2>}, {transform_indices = @transform_3, window_bounds = array<i64: 128, 512>}]} {
    %c0 = arith.constant 0 : index
    %c0_0 = arith.constant 0 : index
    %0 = vector.load %arg2[%c0, %c0_0] : memref<128x8xf32, #tpu.memory_space<vmem>>, vector<128x8xf32>
    %c0_1 = arith.constant 0 : index
    %c0_2 = arith.constant 0 : index
    %1 = vector.load %arg3[%c0_1, %c0_2] : memref<128x2xf32, #tpu.memory_space<vmem>>, vector<128x1xf32>
    %c0_3 = arith.constant 0 : index
    %c1 = arith.constant 1 : index
    %2 = vector.load %arg3[%c0_3, %c1] : memref<128x2xf32, #tpu.memory_space<vmem>>, vector<128x1xf32>
    %c0_i32 = arith.constant 0 : i32
    %c256_i32 = arith.constant 256 : i32
    %3 = arith.muli %c0_i32, %c256_i32 : i32
    %4 = tpu.assume_multiple %3, 256 : i32
    %c0_4 = arith.constant 0 : index
    %5 = arith.index_cast %4 : i32 to index
    %6 = vector.load %arg1[%c0_4, %5] : memref<8x512xf32, #tpu.memory_space<vmem>>, vector<8x256xf32>
    %cst = arith.constant dense<0.000000e+00> : vector<128x256xf32>
    %7 = tpu.matmul %0, %6, %cst {dimension_numbers = #tpu.dot_dimension_numbers<[1], [0], [0], [1], [0, 0, 1, 1], [], []>} : vector<128x8xf32>, vector<8x256xf32>, vector<128x256xf32> -> vector<128x256xf32>
    %8 = vector.broadcast %1 : vector<128x1xf32> to vector<128x256xf32>
    %9 = arith.addf %7, %8 : vector<128x256xf32>
    %cst_5 = arith.constant 0.000000e+00 : f32
    %10 = vector.broadcast %cst_5 : f32 to vector<128x256xf32>
    %11 = arith.cmpf oge, %9, %10 : vector<128x256xf32>
    %12 = vector.broadcast %2 : vector<128x1xf32> to vector<128x256xf32>
    %13 = arith.mulf %12, %9 : vector<128x256xf32>
    %14 = arith.select %11, %9, %13 : vector<128x256xi1>, vector<128x256xf32>
    %c0_6 = arith.constant 0 : index
    %15 = arith.index_cast %4 : i32 to index
    %16 = vector.load %arg4[%c0_6, %15] : memref<128x512xf32, #tpu.memory_space<vmem>>, vector<128x256xf32>
    tpu.vector_store %arg4[%c0_6, %15], %14 {strides = array<i32>} : memref<128x512xf32, #tpu.memory_space<vmem>>, vector<128x256xf32>,
    %c1_i32 = arith.constant 1 : i32
    %c256_i32_7 = arith.constant 256 : i32
    %17 = arith.muli %c1_i32, %c256_i32_7 : i32
    %18 = tpu.assume_multiple %17, 256 : i32
    %c0_8 = arith.constant 0 : index
    %19 = arith.index_cast %18 : i32 to index
    %20 = vector.load %arg1[%c0_8, %19] : memref<8x512xf32, #tpu.memory_space<vmem>>, vector<8x256xf32>
    %cst_9 = arith.constant dense<0.000000e+00> : vector<128x256xf32>
    %21 = tpu.matmul %0, %20, %cst_9 {dimension_numbers = #tpu.dot_dimension_numbers<[1], [0], [0], [1], [0, 0, 1, 1], [], []>} : vector<128x8xf32>, vector<8x256xf32>, vector<128x256xf32> -> vector<128x256xf32>
    %22 = vector.broadcast %1 : vector<128x1xf32> to vector<128x256xf32>
    %23 = arith.addf %21, %22 : vector<128x256xf32>
    %cst_10 = arith.constant 0.000000e+00 : f32
    %24 = vector.broadcast %cst_10 : f32 to vector<128x256xf32>
    %25 = arith.cmpf oge, %23, %24 : vector<128x256xf32>
    %26 = vector.broadcast %2 : vector<128x1xf32> to vector<128x256xf32>
    %27 = arith.mulf %26, %23 : vector<128x256xf32>
    %28 = arith.select %25, %23, %27 : vector<128x256xi1>, vector<128x256xf32>
    %c0_11 = arith.constant 0 : index
    %29 = arith.index_cast %18 : i32 to index
    %30 = vector.load %arg4[%c0_11, %29] : memref<128x512xf32, #tpu.memory_space<vmem>>, vector<128x256xf32>
    tpu.vector_store %arg4[%c0_11, %29], %28 {strides = array<i32>} : memref<128x512xf32, #tpu.memory_space<vmem>>, vector<128x256xf32>,
    %c2_i32 = arith.constant 2 : i32
    return
  }
  func.func @transform_0(%arg0: i32) -> (i32, i32) {
    %c0_i32 = arith.constant 0 : i32
    %c0_i32_0 = arith.constant 0 : i32
    return %c0_i32, %arg0 : i32, i32
  }
  func.func @transform_1(%arg0: i32) -> (i32, i32) {
    %c0_i32 = arith.constant 0 : i32
    %c0_i32_0 = arith.constant 0 : i32
    %c0_i32_1 = arith.constant 0 : i32
    return %c0_i32, %c0_i32_0 : i32, i32
  }
  func.func @transform_2(%arg0: i32) -> (i32, i32) {
    %c0_i32 = arith.constant 0 : i32
    %c0_i32_0 = arith.constant 0 : i32
    %c0_i32_1 = arith.constant 0 : i32
    return %c0_i32, %c0_i32_0 : i32, i32
  }
  func.func @transform_3(%arg0: i32) -> (i32, i32) {
    %c0_i32 = arith.constant 0 : i32
    %c0_i32_0 = arith.constant 0 : i32
    return %c0_i32, %arg0 : i32, i32
  }
}

</mosaic_0001>

<llo_original>
// kernel: tile.29
$region0: #{tile.29}
  %s0 = inlined_call_operand.vmem [shape: f32[8,16], index: 0, kind: input, shape index: {}]
  %s1 = inlined_call_operand.vmem [shape: f32[128,1], index: 1, kind: output, shape index: {}]
  $region1: #{tile.29} parent=0
    #allocation0 [shape = 'u8[4096]{0}', space=vmem, size = 0x1000, scoped, tag = 'scoped mem for output reshape']
    %v2 = vld [vmem:[%s0] sm:$0x1]
    %vm3 = vcmask 130048
    %4 = vst.msk [vmem:[#allocation0] sm:$0x1] %vm3, %v2
    %s5 = scalar_lea.vmem %s0, 7
    %v6 = vld [vmem:[%s5] sm:$0x1]
    %7 = vrot.lane.b32.xlu0 %v6, 112
    %v8 = vpop.permute.xlu0 %7
    %vm9 = vcmask 1048448
    %10 = vst.msk [vmem:[#allocation0] sm:$0x1] %vm9, %v8
    %s11 = scalar_lea.vmem %s0, 6
    %v12 = vld [vmem:[%s11] sm:$0x1]
    %13 = vrot.lane.b32.xlu0 %v12, 96
    %v14 = vpop.permute.xlu0 %13
    %vm15 = vcmask 917248
    %16 = vst.msk [vmem:[#allocation0] sm:$0x1] %vm15, %v14
    %s17 = scalar_lea.vmem %s0, 5
    %v18 = vld [vmem:[%s17] sm:$0x1]
    %19 = vrot.lane.b32.xlu0 %v18, 80
    %v20 = vpop.permute.xlu0 %19
    %vm21 = vcmask 786048
    %22 = vst.msk [vmem:[#allocation0] sm:$0x1] %vm21, %v20
    %s23 = scalar_lea.vmem %s0, 4
    %v24 = vld [vmem:[%s23] sm:$0x1]
    %25 = vrot.lane.b32.xlu0 %v24, 64
    %v26 = vpop.permute.xlu0 %25
    %vm27 = vcmask 654848
    %28 = vst.msk [vmem:[#allocation0] sm:$0x1] %vm27, %v26
    %s29 = scalar_lea.vmem %s0, 3
    %v30 = vld [vmem:[%s29] sm:$0x1]
    %31 = vrot.lane.b32.xlu0 %v30, 48
    %v32 = vpop.permute.xlu0 %31
    %vm33 = vcmask 523648
    %34 = vst.msk [vmem:[#allocation0] sm:$0x1] %vm33, %v32
    %s35 = scalar_lea.vmem %s0, 2
    %v36 = vld [vmem:[%s35] sm:$0x1]
    %37 = vrot.lane.b32.xlu0 %v36, 32
    %v38 = vpop.permute.xlu0 %37
    %vm39 = vcmask 392448
    %40 = vst.msk [vmem:[#allocation0] sm:$0x1] %vm39, %v38
    %s41 = scalar_lea.vmem %s0, 1
    %v42 = vld [vmem:[%s41] sm:$0x1]
    %43 = vrot.lane.b32.xlu0 %v42, 16
    %v44 = vpop.permute.xlu0 %43
    %vm45 = vcmask 261248
    %46 = vst.msk [vmem:[#allocation0] sm:$0x1] %vm45, %v44
    %s48 = ssub.s32 2, 1
    %v49 = vld [vmem:[#allocation0] sm:%s48]
    %s51 = ssub.s32 2, 1
    %52 = vst [vmem:[%s1] sm:%s51] %v49

// kernel: tile.26
$region0: #{tile.26}
  #allocation2 [shape = 's32[1]{0}', space=sflag, size = 0x4, scoped, tag = 'scoped memory for tile.26']
  %s0 = inlined_call_operand.hbm [shape: f32[16], index: 0, kind: input, shape index: {}]
  %s1 = inlined_call_operand.vmem [shape: f32[8,16], index: 1, kind: output, shape index: {}]
  $region1: #{tile.26} parent=0
    #allocation0 [shape = 'u8[512]{0}', space=vmem, size = 0x400, scoped, tag = 'operand span for operand 0']
    #allocation1 [shape = 's32[1]{0}', space=sflag, size = 0x4, scoped, tag = 'scoped memory for tile.26']
    %2 = vsyncpa [#allocation1], 0
    // Predicated region
    $region2: #{tile.26} parent=1 // pred_check
      _
    $region3: #{tile.26} parent=1 // pred_check_branch
      %4 = sbr.rel (0) target = $region5
    $region4: #{tile.26} parent=1 // pred_region
      %6 = vsyncadd [#allocation1], 0
      %s8 = sshll.u32 %s0, 4
      %s9 = int_to_ptr.hbm [resolvable:$true] %s8
      %s10 = sshll.u32 [#allocation0], 4
      %s11 = int_to_ptr.vmem [resolvable:$true] %s10
      %13 = dma.hbm_to_vmem [thread:$0]  %s9, 16, %s11, [#allocation1]
    $region5: #{tile.26} parent=1 // pred_fallthru
      _
    // Predicated region
    $region6: #{tile.26} parent=1 // pred_check
      _
    $region7: #{tile.26} parent=1 // pred_check_branch
      %15 = sbr.rel (0) target = $region9
    $region8: #{tile.26} parent=1 // pred_region
      %17 = dma.done [#allocation1], 16
    $region9: #{tile.26} parent=1 // pred_fallthru
      _
    %v18 = vld [vmem:[#allocation0] ss:$0 sm:$0xff]
    %19 = vst [vmem:[%s1] sm:$0xff] %v18
    %20 = vsyncpa [#allocation1], 1

// kernel: tile.22
$region0: #{tile.22}
  #allocation0 [shape = 's32[1]{0}', space=sflag, size = 0x4, scoped, tag = 'scoped memory for tile.22']
  %s0 = inlined_call_operand.vmem [shape: f32[16], index: 0, kind: input, shape index: {}]
  %s1 = inlined_call_operand.vmem [shape: f32[8,16], index: 1, kind: output, shape index: {}]
  // Predicated region
  $region2: #{tile.22} parent=0 // pred_check
    _
  $region3: #{tile.22} parent=0 // pred_check_branch
    %3 = sbr.rel (0) target = $region5
  $region4: #{tile.22} parent=0 // pred_region
    _
  $region5: #{tile.22} parent=0 // pred_fallthru
    _
  %v4 = vld [vmem:[%s0] ss:$0 sm:$0xff]
  %5 = vst [vmem:[%s1] sm:$0xff] %v4

// kernel: mul.13
$region0: #{mul.13}
  %s0 = inlined_call_operand.vmem [shape: f32[8,16], index: 0, kind: input, shape index: {}]
  %s1 = inlined_call_operand.vmem [shape: f32[128], index: 1, kind: output, shape index: {}]
  $region1: #{mul.13} parent=0
    #allocation0 [shape = 'u8[4096]{0}', space=vmem, size = 0x1000, scoped, tag = 'scoped mem for output reshape']
    %v2 = vld [vmem:[%s0] sm:$0x1]
    %vm3 = vcmask 130048
    %4 = vst.msk [vmem:[#allocation0] sm:$0x1] %vm3, %v2
    %s5 = scalar_lea.vmem %s0, 7
    %v6 = vld [vmem:[%s5] sm:$0x1]
    %7 = vrot.lane.b32.xlu0 %v6, 112
    %v8 = vpop.permute.xlu0 %7
    %vm9 = vcmask 1048448
    %10 = vst.msk [vmem:[#allocation0] sm:$0x1] %vm9, %v8
    %s11 = scalar_lea.vmem %s0, 6
    %v12 = vld [vmem:[%s11] sm:$0x1]
    %13 = vrot.lane.b32.xlu0 %v12, 96
    %v14 = vpop.permute.xlu0 %13
    %vm15 = vcmask 917248
    %16 = vst.msk [vmem:[#allocation0] sm:$0x1] %vm15, %v14
    %s17 = scalar_lea.vmem %s0, 5
    %v18 = vld [vmem:[%s17] sm:$0x1]
    %19 = vrot.lane.b32.xlu0 %v18, 80
    %v20 = vpop.permute.xlu0 %19
    %vm21 = vcmask 786048
    %22 = vst.msk [vmem:[#allocation0] sm:$0x1] %vm21, %v20
    %s23 = scalar_lea.vmem %s0, 4
    %v24 = vld [vmem:[%s23] sm:$0x1]
    %25 = vrot.lane.b32.xlu0 %v24, 64
    %v26 = vpop.permute.xlu0 %25
    %vm27 = vcmask 654848
    %28 = vst.msk [vmem:[#allocation0] sm:$0x1] %vm27, %v26
    %s29 = scalar_lea.vmem %s0, 3
    %v30 = vld [vmem:[%s29] sm:$0x1]
    %31 = vrot.lane.b32.xlu0 %v30, 48
    %v32 = vpop.permute.xlu0 %31
    %vm33 = vcmask 523648
    %34 = vst.msk [vmem:[#allocation0] sm:$0x1] %vm33, %v32
    %s35 = scalar_lea.vmem %s0, 2
    %v36 = vld [vmem:[%s35] sm:$0x1]
    %37 = vrot.lane.b32.xlu0 %v36, 32
    %v38 = vpop.permute.xlu0 %37
    %vm39 = vcmask 392448
    %40 = vst.msk [vmem:[#allocation0] sm:$0x1] %vm39, %v38
    %s41 = scalar_lea.vmem %s0, 1
    %v42 = vld [vmem:[%s41] sm:$0x1]
    %43 = vrot.lane.b32.xlu0 %v42, 16
    %v44 = vpop.permute.xlu0 %43
    %vm45 = vcmask 261248
    %46 = vst.msk [vmem:[#allocation0] sm:$0x1] %vm45, %v44
    %s48 = ssub.s32 2, 1
    %v49 = vld [vmem:[#allocation0] sm:%s48]
    %s51 = ssub.s32 2, 1
    %52 = vst [vmem:[%s1] sm:%s51] %v49

// kernel: up_conv_forward.2
$region0: #{up_conv_forward.2}
  #allocation0 [shape = 'u32[]', space=smem, size = 0x4, offset = 0x4, fixed_abs, tag = 'smem constant byte address 0x4 - core index']
  #allocation1 [shape = 'u32[72,128]{1,0:T(1,128)}', space=vmem, size = 0x9000, scoped, tag = 'internal scratch']
  %s0 = inlined_call_operand.vmem [shape: f32[8,1024], index: 0, kind: input, shape index: {}]
  %s1 = inlined_call_operand.vmem [shape: f32[2,8,9], index: 1, kind: output, shape index: {}]
  %s2 = sld [smem:[#allocation0]]
  $region37: #{up_conv_forward.2} parent=0
    _
  %s4 = ssub.s32 1, %s2
  %s5 = scalar_select 0, %s4, %s2
  loop: start=0, step=1, limit=4
  $region2: #{up_conv_forward.2} parent=0 // loop_pre_header
    _
  $region3: #{up_conv_forward.2} parent=0 // loop_header
    %s7 = sphi 0, %s11
    %p8 = scmp.ge.s32.totalorder %s7, 4
    %s17 = sphi 0, %s19
    %s20 = sphi 0, %s17
    %s21 = sphi 0, %s20
    %s37 = sphi 0, %s21
    %s43 = sphi 0, %s45
    %s46 = sphi 0, %s43
    %s47 = sphi 0, %s46
    %s63 = sphi 0, %s47
  $region4: #{up_conv_forward.2} parent=0 // loop_header_branch
    %10 = sbr.rel (%p8) target = $region8
  $region5: #{up_conv_forward.2} parent=0 // loop_body
    %s12 = ssub.s32 %s7, 1
    %s13 = ssub.s32 %s7, 2
    %s14 = sadd.s32 %s7, 1
    %s15 = ssub.s32 %s7, %s14
    %p16 = scmp.eq.s32.totalorder %s15, 0
    %s18 = sadd.s32 %s17, 1
    %s19 = scalar_select %p16, %s17, %s18
    %p22 = pneg %p16
    %p23 = scmp.eq.s32.totalorder %s7, 1
    %p24 = por %p22, %p23
    %p25 = scmp.ne.s32.totalorder %s17, %s20
    %p26 = scmp.eq.s32.totalorder %s7, 0
    %p27 = por %p25, %p26
    %p28 = scmp.ne.s32.totalorder %s17, %s20
    %p29 = scmp.eq.s32.totalorder %s12, 1
    %p30 = por %p28, %p29
    %p31 = scmp.ne.s32.totalorder %s20, %s21
    %p32 = scmp.eq.s32.totalorder %s12, 0
    %p33 = por %p31, %p32
    %p34 = scmp.ne.s32.totalorder %s20, %s21
    %p35 = scmp.eq.s32.totalorder %s13, 1
    %p36 = por %p34, %p35
    %p38 = scmp.ne.s32.totalorder %s21, %s37
    %p39 = scmp.eq.s32.totalorder %s13, 0
    %p40 = por %p38, %p39
    %s41 = ssub.s32 %s7, %s14
    %p42 = scmp.eq.s32.totalorder %s41, 0
    %s44 = sadd.s32 %s43, 1
    %s45 = scalar_select %p42, %s43, %s44
    %p48 = pneg %p42
    %p49 = scmp.eq.s32.totalorder %s7, 1
    %p50 = por %p48, %p49
    %p51 = scmp.ne.s32.totalorder %s43, %s46
    %p52 = scmp.eq.s32.totalorder %s7, 0
    %p53 = por %p51, %p52
    %p54 = scmp.ne.s32.totalorder %s43, %s46
    %p55 = scmp.eq.s32.totalorder %s12, 1
    %p56 = por %p54, %p55
    %p57 = scmp.ne.s32.totalorder %s46, %s47
    %p58 = scmp.eq.s32.totalorder %s12, 0
    %p59 = por %p57, %p58
    %p60 = scmp.ne.s32.totalorder %s46, %s47
    %p61 = scmp.eq.s32.totalorder %s13, 1
    %p62 = por %p60, %p61
    %p64 = scmp.ne.s32.totalorder %s47, %s63
    %p65 = scmp.eq.s32.totalorder %s13, 0
    %p66 = por %p64, %p65
    %p67 = scmp.le.s32.totalorder 1, %s7
    %p68 = scmp.lt.s32.totalorder %s7, 3
    %p69 = pnand %p67, %p68
    %p70 = pneg %p69
    // Predicated region
    $region9: #{up_conv_forward.2} parent=5 // pred_check
      _
    $region10: #{up_conv_forward.2} parent=5 // pred_check_branch
      %72 = sbr.rel (%p69) target = $region12
    $region11: #{up_conv_forward.2} parent=5 // pred_region
      %s73 = ssub.s32 %s7, 1
    $region12: #{up_conv_forward.2} parent=5 // pred_fallthru
      _
    %p74 = scmp.lt.s32.totalorder %s7, 2
    // Predicated region
    $region13: #{up_conv_forward.2} parent=5 // pred_check
      %p75 = pneg %p74
    $region14: #{up_conv_forward.2} parent=5 // pred_check_branch
      %77 = sbr.rel (%p75) target = $region16
    $region15: #{up_conv_forward.2} parent=5 // pred_region
      // Predicated region
      $region17: #{up_conv_forward.2} parent=15 // pred_check
        %p78 = pneg %p27
      $region18: #{up_conv_forward.2} parent=15 // pred_check_branch
        %80 = sbr.rel (%p78) target = $region20
      $region19: #{up_conv_forward.2} parent=15 // pred_region
        %s81 = smul.u32 4, %s7
        %p82 = scmp.lt.s32.totalorder %s81, 7
        %s83 = scalar_select %p82, %s81, 7
        %s84 = smul.addr %s83, 8
        %s85 = scalar_lea.vmem %s0, %s84
        %s86 = smul.u32 4, %s7
      $region20: #{up_conv_forward.2} parent=15 // pred_fallthru
        _
    $region16: #{up_conv_forward.2} parent=5 // pred_fallthru
      _
    %p87 = scmp.le.s32.totalorder 1, %s7
    %p88 = scmp.lt.s32.totalorder %s7, 3
    %p89 = pnand %p87, %p88
    %p90 = pneg %p89
    // Predicated region
    $region21: #{up_conv_forward.2} parent=5 // pred_check
      _
    $region22: #{up_conv_forward.2} parent=5 // pred_check_branch
      %92 = sbr.rel (%p89) target = $region24
    $region23: #{up_conv_forward.2} parent=5 // pred_region
      %s93 = ssub.s32 %s7, 1
      %s94 = smul.u32 4, %s12
      %p95 = scmp.lt.s32.totalorder %s94, 7
      %s96 = scalar_select %p95, %s94, 7
      %s97 = smul.addr %s96, 8
      %s98 = scalar_lea.vmem %s0, %s97
      %p99 = pneg %p33
      %p100 = pneg %p30
      %p101 = pneg %p59
      %p102 = pneg %p56
      %p103 = scmp.lt.s32.totalorder %s12, 1
      %s104 = scalar_select %p103, %s12, 1
      %s105 = smul.addr %s104, 8
      %s106 = scalar_lea.vmem %s1, %s105
      %s107 = smul.u32 4, %s12
      %p108 = scmp.lt.s32.totalorder %s107, 7
      %s109 = scalar_select %p108, %s107, 7
      %s110 = smul.addr %s109, 8
      %s111 = scalar_lea.vmem %s0, %s110
      %s112 = smul.u32 4, %s12
      %p113 = scmp.lt.s32.totalorder %s12, 1
      %s114 = scalar_select %p113, %s12, 1
      %s115 = smul.addr %s114, 8
      %s116 = scalar_lea.vmem %s1, %s115
      %v117 = vld [vmem:[%s111] sm:$0xff]
      %v118 = vld [vmem:[%s111 + $0x8] sm:$0xff]
      %v119 = vadd.f32 %v117, %v118
      %120 = vadd.xlane.f32.xlu0 %v119
      %v121 = vpop.xlane.xlu0 %120
      %v122 = vadd.f32 %v121, 0.0
      %s123 = scalar_lea.vmem %s111, 16
      %v124 = vld [vmem:[%s123] sm:$0xff]
      %v125 = vld [vmem:[%s123 + $0x8] sm:$0xff]
      %126 = vmatpush.xpose.msra.mxu0 0.0
      %127 = vmatpush.xpose.msra.mxu0 0.0
      %128 = vmatpush.xpose.msra.mxu0 0.0
      %129 = vmatpush.xpose.msra.mxu0 0.0
      %130 = vmatpush.xpose.msra.mxu0 0.0
      %131 = vmatpush.xpose.msra.mxu0 0.0
      %132 = vmatpush.xpose.msra.mxu0 0.0
      %133 = vmatpush.xpose.msra.mxu0 0.0
      %134 = vmatpush.xpose.msra.mxu0 0.0
      %135 = vmatpush.xpose.msra.mxu0 0.0
      %136 = vmatpush.xpose.msra.mxu0 0.0
      %137 = vmatpush.xpose.msra.mxu0 0.0
      %138 = vmatpush.xpose.msra.mxu0 0.0
      %139 = vmatpush.xpose.msra.mxu0 0.0
      %140 = vmatpush.xpose.msra.mxu0 0.0
      %141 = vmatpush.xpose.msra.mxu0 %v124
      %142 = vmatmul.f32.gmra.mxu0 %v124
      %v143 = vpop.f32.mrf.mxu0
      %v144 = vadd.f32 0.0, %v143
      %145 = vdwg.mxu0
      %146 = vmatpush.xpose.msra.mxu0 0.0
      %147 = vmatpush.xpose.msra.mxu0 0.0
      %148 = vmatpush.xpose.msra.mxu0 0.0
      %149 = vmatpush.xpose.msra.mxu0 0.0
      %150 = vmatpush.xpose.msra.mxu0 0.0
      %151 = vmatpush.xpose.msra.mxu0 0.0
      %152 = vmatpush.xpose.msra.mxu0 0.0
      %153 = vmatpush.xpose.msra.mxu0 0.0
      %154 = vmatpush.xpose.msra.mxu0 0.0
      %155 = vmatpush.xpose.msra.mxu0 0.0
      %156 = vmatpush.xpose.msra.mxu0 0.0
      %157 = vmatpush.xpose.msra.mxu0 0.0
      %158 = vmatpush.xpose.msra.mxu0 0.0
      %159 = vmatpush.xpose.msra.mxu0 0.0
      %160 = vmatpush.xpose.msra.mxu0 0.0
      %161 = vmatpush.xpose.msra.mxu0 %v125
      %162 = vmatmul.f32.gmra.mxu0 %v125
      %v163 = vpop.f32.mrf.mxu0
      %v164 = vadd.f32 %v144, %v163
      %165 = vdwg.mxu0
      %166 = vmatpush.xpose.msra.mxu0 0.0
      %167 = vmatpush.xpose.msra.mxu0 0.0
      %168 = vmatpush.xpose.msra.mxu0 0.0
      %169 = vmatpush.xpose.msra.mxu0 0.0
      %170 = vmatpush.xpose.msra.mxu0 0.0
      %171 = vmatpush.xpose.msra.mxu0 0.0
      %172 = vmatpush.xpose.msra.mxu0 0.0
      %173 = vmatpush.xpose.msra.mxu0 0.0
      %174 = vmatpush.xpose.msra.mxu0 0.0
      %175 = vmatpush.xpose.msra.mxu0 0.0
      %176 = vmatpush.xpose.msra.mxu0 0.0
      %177 = vmatpush.xpose.msra.mxu0 0.0
      %178 = vmatpush.xpose.msra.mxu0 0.0
      %179 = vmatpush.xpose.msra.mxu0 0.0
      %180 = vmatpush.xpose.msra.mxu0 0.0
      %181 = vmatpush.xpose.msra.mxu0 %v117
      %182 = vmatmul.f32.gmra.mxu0 %v117
      %v183 = vpop.f32.mrf.mxu0
      %v184 = vadd.f32 %v164, %v183
      %185 = vdwg.mxu0
      %186 = vmatpush.xpose.msra.mxu0 0.0
      %187 = vmatpush.xpose.msra.mxu0 0.0
      %188 = vmatpush.xpose.msra.mxu0 0.0
      %189 = vmatpush.xpose.msra.mxu0 0.0
      %190 = vmatpush.xpose.msra.mxu0 0.0
      %191 = vmatpush.xpose.msra.mxu0 0.0
      %192 = vmatpush.xpose.msra.mxu0 0.0
      %193 = vmatpush.xpose.msra.mxu0 0.0
      %194 = vmatpush.xpose.msra.mxu0 0.0
      %195 = vmatpush.xpose.msra.mxu0 0.0
      %196 = vmatpush.xpose.msra.mxu0 0.0
      %197 = vmatpush.xpose.msra.mxu0 0.0
      %198 = vmatpush.xpose.msra.mxu0 0.0
      %199 = vmatpush.xpose.msra.mxu0 0.0
      %200 = vmatpush.xpose.msra.mxu0 0.0
      %201 = vmatpush.xpose.msra.mxu0 %v118
      %202 = vmatmul.f32.gmra.mxu0 %v118
      %v203 = vpop.f32.mrf.mxu0
      %v204 = vadd.f32 %v184, %v203
      %205 = vdwg.mxu0
      %v206 = vadd.f32 %v124, %v125
      %207 = vadd.xlane.f32.xlu0 %v206
      %v208 = vpop.xlane.xlu0 %207
      %v209 = vadd.f32 %v122, %v208
      %vm210 = vcmask 64512
      %211 = vst.msk [vmem:[%s116] sm:$0xff] %vm210, %v204
      %vm212 = vcmask 72768
      %213 = vst.msk [vmem:[%s116] sm:$0xff] %vm212, %v209
      %p214 = scmp.lt.s32.totalorder %s12, 1
      %s215 = scalar_select %p214, %s12, 1
      %s216 = smul.addr %s215, 8
      %s217 = scalar_lea.vmem %s1, %s216
      // Predicated region
      $region25: #{up_conv_forward.2} parent=23 // pred_check
        %p218 = pneg %p56
      $region26: #{up_conv_forward.2} parent=23 // pred_check_branch
        %220 = sbr.rel (%p218) target = $region28
      $region27: #{up_conv_forward.2} parent=23 // pred_region
        _
      $region28: #{up_conv_forward.2} parent=23 // pred_fallthru
        _
    $region24: #{up_conv_forward.2} parent=5 // pred_fallthru
      _
    %p221 = scmp.le.s32.totalorder 2, %s7
    // Predicated region
    $region29: #{up_conv_forward.2} parent=5 // pred_check
      %p222 = pneg %p221
    $region30: #{up_conv_forward.2} parent=5 // pred_check_branch
      %224 = sbr.rel (%p222) target = $region32
    $region31: #{up_conv_forward.2} parent=5 // pred_region
      %s225 = ssub.s32 %s7, 2
      // Predicated region
      $region33: #{up_conv_forward.2} parent=31 // pred_check
        %p226 = pneg %p62
      $region34: #{up_conv_forward.2} parent=31 // pred_check_branch
        %228 = sbr.rel (%p226) target = $region36
      $region35: #{up_conv_forward.2} parent=31 // pred_region
        %p229 = scmp.lt.s32.totalorder %s13, 1
        %s230 = scalar_select %p229, %s13, 1
        %s231 = smul.addr %s230, 8
        %s232 = scalar_lea.vmem %s1, %s231
      $region36: #{up_conv_forward.2} parent=31 // pred_fallthru
        _
    $region32: #{up_conv_forward.2} parent=5 // pred_fallthru
      _
  $region6: #{up_conv_forward.2} parent=0 // loop_footer
    %s11 = sadd.s32 1, %s7
  $region7: #{up_conv_forward.2} parent=0 // loop_footer_branch
    %6 = sbr.rel target = $region3
  $region8: #{up_conv_forward.2} parent=0 // loop_exit
    _

// kernel: up_conv_forward.3
$region0: #{up_conv_forward.3}
  #allocation0 [shape = 'u32[]', space=smem, size = 0x4, offset = 0x4, fixed_abs, tag = 'smem constant byte address 0x4 - core index']
  #allocation1 [shape = 'u32[72,128]{1,0:T(1,128)}', space=vmem, size = 0x9000, scoped, tag = 'internal scratch']
  %s0 = inlined_call_operand.vmem [shape: f32[8,1024], index: 0, kind: input, shape index: {}]
  %s1 = inlined_call_operand.vmem [shape: f32[128,8], index: 1, kind: input, shape index: {}]
  %s2 = inlined_call_operand.vmem [shape: f32[128,2], index: 2, kind: input, shape index: {}]
  %s3 = inlined_call_operand.vmem [shape: f32[128,1024], index: 3, kind: output, shape index: {}]
  %s4 = sld [smem:[#allocation0]]
  $region64: #{up_conv_forward.3} parent=0
    _
  %s6 = ssub.s32 1, %s4
  %s7 = scalar_select 0, %s6, %s4
  $region1: #{up_conv_forward.3} parent=0
    #allocation2 [shape = 'u8[524288]{0}', space=vmem, size = 0x80000, scoped, tag = 'output window, operand 0']
    loop: start=0, step=1, limit=4
    $region2: #{up_conv_forward.3} parent=1 // loop_pre_header
      _
    $region3: #{up_conv_forward.3} parent=1 // loop_header
      %s9 = sphi 0, %s13
      %p10 = scmp.ge.s32.totalorder %s9, 4
      %s19 = sphi 0, %s21
      %s22 = sphi 0, %s19
      %s23 = sphi 0, %s22
      %s39 = sphi 0, %s23
      %s43 = sphi 0, %s43
      %s45 = sphi 0, %s43
      %s46 = sphi 0, %s45
      %s60 = sphi 0, %s46
      %s64 = sphi 0, %s64
      %s66 = sphi 0, %s64
      %s67 = sphi 0, %s66
      %s81 = sphi 0, %s67
      %s87 = sphi 0, %s89
      %s90 = sphi 0, %s87
      %s91 = sphi 0, %s90
      %s107 = sphi 0, %s91
    $region4: #{up_conv_forward.3} parent=1 // loop_header_branch
      %12 = sbr.rel (%p10) target = $region8
    $region5: #{up_conv_forward.3} parent=1 // loop_body
      %s14 = ssub.s32 %s9, 1
      %s15 = ssub.s32 %s9, 2
      %s16 = sadd.s32 %s9, 1
      %s17 = ssub.s32 %s9, %s16
      %p18 = scmp.eq.s32.totalorder %s17, 0
      %s20 = sadd.s32 %s19, 1
      %s21 = scalar_select %p18, %s19, %s20
      %p24 = pneg %p18
      %p25 = scmp.eq.s32.totalorder %s9, 1
      %p26 = por %p24, %p25
      %p27 = scmp.ne.s32.totalorder %s19, %s22
      %p28 = scmp.eq.s32.totalorder %s9, 0
      %p29 = por %p27, %p28
      %p30 = scmp.ne.s32.totalorder %s19, %s22
      %p31 = scmp.eq.s32.totalorder %s14, 1
      %p32 = por %p30, %p31
      %p33 = scmp.ne.s32.totalorder %s22, %s23
      %p34 = scmp.eq.s32.totalorder %s14, 0
      %p35 = por %p33, %p34
      %p36 = scmp.ne.s32.totalorder %s22, %s23
      %p37 = scmp.eq.s32.totalorder %s15, 1
      %p38 = por %p36, %p37
      %p40 = scmp.ne.s32.totalorder %s23, %s39
      %p41 = scmp.eq.s32.totalorder %s15, 0
      %p42 = por %p40, %p41
      %s44 = sadd.s32 %s43, 1
      %p47 = scmp.eq.s32.totalorder %s9, 1
      %p48 = scmp.ne.s32.totalorder %s43, %s45
      %p49 = scmp.eq.s32.totalorder %s9, 0
      %p50 = por %p48, %p49
      %p51 = scmp.ne.s32.totalorder %s43, %s45
      %p52 = scmp.eq.s32.totalorder %s14, 1
      %p53 = por %p51, %p52
      %p54 = scmp.ne.s32.totalorder %s45, %s46
      %p55 = scmp.eq.s32.totalorder %s14, 0
      %p56 = por %p54, %p55
      %p57 = scmp.ne.s32.totalorder %s45, %s46
      %p58 = scmp.eq.s32.totalorder %s15, 1
      %p59 = por %p57, %p58
      %p61 = scmp.ne.s32.totalorder %s46, %s60
      %p62 = scmp.eq.s32.totalorder %s15, 0
      %p63 = por %p61, %p62
      %s65 = sadd.s32 %s64, 1
      %p68 = scmp.eq.s32.totalorder %s9, 1
      %p69 = scmp.ne.s32.totalorder %s64, %s66
      %p70 = scmp.eq.s32.totalorder %s9, 0
      %p71 = por %p69, %p70
      %p72 = scmp.ne.s32.totalorder %s64, %s66
      %p73 = scmp.eq.s32.totalorder %s14, 1
      %p74 = por %p72, %p73
      %p75 = scmp.ne.s32.totalorder %s66, %s67
      %p76 = scmp.eq.s32.totalorder %s14, 0
      %p77 = por %p75, %p76
      %p78 = scmp.ne.s32.totalorder %s66, %s67
      %p79 = scmp.eq.s32.totalorder %s15, 1
      %p80 = por %p78, %p79
      %p82 = scmp.ne.s32.totalorder %s67, %s81
      %p83 = scmp.eq.s32.totalorder %s15, 0
      %p84 = por %p82, %p83
      %s85 = ssub.s32 %s9, %s16
      %p86 = scmp.eq.s32.totalorder %s85, 0
      %s88 = sadd.s32 %s87, 1
      %s89 = scalar_select %p86, %s87, %s88
      %p92 = pneg %p86
      %p93 = scmp.eq.s32.totalorder %s9, 1
      %p94 = por %p92, %p93
      %p95 = scmp.ne.s32.totalorder %s87, %s90
      %p96 = scmp.eq.s32.totalorder %s9, 0
      %p97 = por %p95, %p96
      %p98 = scmp.ne.s32.totalorder %s87, %s90
      %p99 = scmp.eq.s32.totalorder %s14, 1
      %p100 = por %p98, %p99
      %p101 = scmp.ne.s32.totalorder %s90, %s91
      %p102 = scmp.eq.s32.totalorder %s14, 0
      %p103 = por %p101, %p102
      %p104 = scmp.ne.s32.totalorder %s90, %s91
      %p105 = scmp.eq.s32.totalorder %s15, 1
      %p106 = por %p104, %p105
      %p108 = scmp.ne.s32.totalorder %s91, %s107
      %p109 = scmp.eq.s32.totalorder %s15, 0
      %p110 = por %p108, %p109
      %p111 = scmp.le.s32.totalorder 1, %s9
      %p112 = scmp.lt.s32.totalorder %s9, 3
      %p113 = pnand %p111, %p112
      %p114 = pneg %p113
      // Predicated region
      $region9: #{up_conv_forward.3} parent=5 // pred_check
        _
      $region10: #{up_conv_forward.3} parent=5 // pred_check_branch
        %116 = sbr.rel (%p113) target = $region12
      $region11: #{up_conv_forward.3} parent=5 // pred_region
        %s117 = ssub.s32 %s9, 1
        // Predicated region
        $region13: #{up_conv_forward.3} parent=11 // pred_check
          %p118 = pneg %p56
        $region14: #{up_conv_forward.3} parent=11 // pred_check_branch
          %120 = sbr.rel (%p118) target = $region16
        $region15: #{up_conv_forward.3} parent=11 // pred_region
          _
        $region16: #{up_conv_forward.3} parent=11 // pred_fallthru
          _
        // Predicated region
        $region17: #{up_conv_forward.3} parent=11 // pred_check
          %p121 = pneg %p77
        $region18: #{up_conv_forward.3} parent=11 // pred_check_branch
          %123 = sbr.rel (%p121) target = $region20
        $region19: #{up_conv_forward.3} parent=11 // pred_region
          _
        $region20: #{up_conv_forward.3} parent=11 // pred_fallthru
          _
      $region12: #{up_conv_forward.3} parent=5 // pred_fallthru
        _
      %p124 = scmp.lt.s32.totalorder %s9, 2
      // Predicated region
      $region21: #{up_conv_forward.3} parent=5 // pred_check
        %p125 = pneg %p124
      $region22: #{up_conv_forward.3} parent=5 // pred_check_branch
        %127 = sbr.rel (%p125) target = $region24
      $region23: #{up_conv_forward.3} parent=5 // pred_region
        // Predicated region
        $region25: #{up_conv_forward.3} parent=23 // pred_check
          %p128 = pneg %p29
        $region26: #{up_conv_forward.3} parent=23 // pred_check_branch
          %130 = sbr.rel (%p128) target = $region28
        $region27: #{up_conv_forward.3} parent=23 // pred_region
          %s131 = smul.u32 4, %s9
          %p132 = scmp.lt.s32.totalorder %s131, 7
          %s133 = scalar_select %p132, %s131, 7
          %s134 = smul.addr %s133, 8
          %s135 = scalar_lea.vmem %s0, %s134
          %s136 = smul.u32 4, %s9
        $region28: #{up_conv_forward.3} parent=23 // pred_fallthru
          _
      $region24: #{up_conv_forward.3} parent=5 // pred_fallthru
        _
      %p137 = scmp.le.s32.totalorder 1, %s9
      %p138 = scmp.lt.s32.totalorder %s9, 3
      %p139 = pnand %p137, %p138
      %p140 = pneg %p139
      // Predicated region
      $region29: #{up_conv_forward.3} parent=5 // pred_check
        _
      $region30: #{up_conv_forward.3} parent=5 // pred_check_branch
        %142 = sbr.rel (%p139) target = $region32
      $region31: #{up_conv_forward.3} parent=5 // pred_region
        %s143 = ssub.s32 %s9, 1
        %s144 = smul.u32 4, %s14
        %p145 = scmp.lt.s32.totalorder %s144, 7
        %s146 = scalar_select %p145, %s144, 7
        %s147 = smul.addr %s146, 8
        %s148 = scalar_lea.vmem %s0, %s147
        %p149 = pneg %p35
        %p150 = pneg %p32
        %p151 = pneg %p56
        %p152 = pneg %p53
        %p153 = pneg %p77
        %p154 = pneg %p74
        %p155 = pneg %p103
        %p156 = pneg %p100
        %s157 = sand.u32 %s90, 1
        %s158 = sand.u32 %s90, 1
        %s159 = smul.addr %s158, 512
        %s160 = scalar_lea.vmem [#allocation2], %s159
        %s161 = smul.u32 4, %s14
        %p162 = scmp.lt.s32.totalorder %s161, 7
        %s163 = scalar_select %p162, %s161, 7
        %s164 = smul.addr %s163, 8
        %s165 = scalar_lea.vmem %s0, %s164
        %s166 = smul.u32 4, %s14
        %s167 = smul.u32 4, %s14
        %v168 = vld [vmem:[%s1] sm:$0xff]
        %v169 = vld [vmem:[%s1 + $0x8] sm:$0xff]
        %v170 = vld [vmem:[%s1 + $0x10] sm:$0xff]
        %v171 = vld [vmem:[%s1 + $0x18] sm:$0xff]
        %v172 = vld [vmem:[%s1 + $0x20] sm:$0xff]
        %v173 = vld [vmem:[%s1 + $0x28] sm:$0xff]
        %v174 = vld [vmem:[%s1 + $0x30] sm:$0xff]
        %v175 = vld [vmem:[%s1 + $0x38] sm:$0xff]
        %v176 = vld [vmem:[%s1 + $0x40] sm:$0xff]
        %v177 = vld [vmem:[%s1 + $0x48] sm:$0xff]
        %v178 = vld [vmem:[%s1 + $0x50] sm:$0xff]
        %v179 = vld [vmem:[%s1 + $0x58] sm:$0xff]
        %v180 = vld [vmem:[%s1 + $0x60] sm:$0xff]
        %v181 = vld [vmem:[%s1 + $0x68] sm:$0xff]
        %v182 = vld [vmem:[%s1 + $0x70] sm:$0xff]
        %v183 = vld [vmem:[%s1 + $0x78] sm:$0xff]
        %v184 = vld [vmem:[%s2] sm:$0xff]
        %v185 = vld [vmem:[%s2 + $0x8] sm:$0xff]
        %v186 = vld [vmem:[%s2 + $0x10] sm:$0xff]
        %v187 = vld [vmem:[%s2 + $0x18] sm:$0xff]
        %v188 = vld [vmem:[%s2 + $0x20] sm:$0xff]
        %v189 = vld [vmem:[%s2 + $0x28] sm:$0xff]
        %v190 = vld [vmem:[%s2 + $0x30] sm:$0xff]
        %v191 = vld [vmem:[%s2 + $0x38] sm:$0xff]
        %v192 = vld [vmem:[%s2 + $0x40] sm:$0xff]
        %v193 = vld [vmem:[%s2 + $0x48] sm:$0xff]
        %v194 = vld [vmem:[%s2 + $0x50] sm:$0xff]
        %v195 = vld [vmem:[%s2 + $0x58] sm:$0xff]
        %v196 = vld [vmem:[%s2 + $0x60] sm:$0xff]
        %v197 = vld [vmem:[%s2 + $0x68] sm:$0xff]
        %v198 = vld [vmem:[%s2 + $0x70] sm:$0xff]
        %v199 = vld [vmem:[%s2 + $0x78] sm:$0xff]
        %v200 = vld [vmem:[%s165] sm:$0xff]
        %v201 = vld [vmem:[%s165 + $0x8] sm:$0xff]
        %203 = vset.pattern.permute.xlu0 0
        %204 = vperm.xlu0 %203, %v184
        %v205 = vpop.permute.xlu0 %204
        %208 = vset.pattern.permute.xlu0 0
        %209 = vperm.xlu0 %208, %v185
        %v210 = vpop.permute.xlu0 %209
        %213 = vset.pattern.permute.xlu0 0
        %214 = vperm.xlu0 %213, %v186
        %v215 = vpop.permute.xlu0 %214
        %218 = vset.pattern.permute.xlu0 0
        %219 = vperm.xlu0 %218, %v187
        %v220 = vpop.permute.xlu0 %219
        %223 = vset.pattern.permute.xlu0 0
        %224 = vperm.xlu0 %223, %v188
        %v225 = vpop.permute.xlu0 %224
        %228 = vset.pattern.permute.xlu0 0
        %229 = vperm.xlu0 %228, %v189
        %v230 = vpop.permute.xlu0 %229
        %233 = vset.pattern.permute.xlu0 0
        %234 = vperm.xlu0 %233, %v190
        %v235 = vpop.permute.xlu0 %234
        %238 = vset.pattern.permute.xlu0 0
        %239 = vperm.xlu0 %238, %v191
        %v240 = vpop.permute.xlu0 %239
        %243 = vset.pattern.permute.xlu0 0
        %244 = vperm.xlu0 %243, %v192
        %v245 = vpop.permute.xlu0 %244
        %248 = vset.pattern.permute.xlu0 0
        %249 = vperm.xlu0 %248, %v193
        %v250 = vpop.permute.xlu0 %249
        %253 = vset.pattern.permute.xlu0 0
        %254 = vperm.xlu0 %253, %v194
        %v255 = vpop.permute.xlu0 %254
        %258 = vset.pattern.permute.xlu0 0
        %259 = vperm.xlu0 %258, %v195
        %v260 = vpop.permute.xlu0 %259
        %263 = vset.pattern.permute.xlu0 0
        %264 = vperm.xlu0 %263, %v196
        %v265 = vpop.permute.xlu0 %264
        %268 = vset.pattern.permute.xlu0 0
        %269 = vperm.xlu0 %268, %v197
        %v270 = vpop.permute.xlu0 %269
        %273 = vset.pattern.permute.xlu0 0
        %274 = vperm.xlu0 %273, %v198
        %v275 = vpop.permute.xlu0 %274
        %278 = vset.pattern.permute.xlu0 0
        %279 = vperm.xlu0 %278, %v199
        %v280 = vpop.permute.xlu0 %279
        %vm282 = vcmask 64512
        %v284 = vsel %vm282, %v168, 0
        %v287 = vsel %vm282, %v169, 0
        %v290 = vsel %vm282, %v170, 0
        %v293 = vsel %vm282, %v171, 0
        %v296 = vsel %vm282, %v172, 0
        %v299 = vsel %vm282, %v173, 0
        %v302 = vsel %vm282, %v174, 0
        %v305 = vsel %vm282, %v175, 0
        %v308 = vsel %vm282, %v176, 0
        %v311 = vsel %vm282, %v177, 0
        %v314 = vsel %vm282, %v178, 0
        %v317 = vsel %vm282, %v179, 0
        %v320 = vsel %vm282, %v180, 0
        %v323 = vsel %vm282, %v181, 0
        %v326 = vsel %vm282, %v182, 0
        %v329 = vsel %vm282, %v183, 0
        %331 = vmatpush.msra.mxu0 0.0
        %332 = vmatpush.msra.mxu0 0.0
        %333 = vmatpush.msra.mxu0 0.0
        %334 = vmatpush.msra.mxu0 0.0
        %335 = vmatpush.msra.mxu0 0.0
        %336 = vmatpush.msra.mxu0 0.0
        %337 = vmatpush.msra.mxu0 0.0
        %338 = vmatpush.msra.mxu0 0.0
        %339 = vmatpush.msra.mxu0 0.0
        %340 = vmatpush.msra.mxu0 0.0
        %341 = vmatpush.msra.mxu0 0.0
        %342 = vmatpush.msra.mxu0 0.0
        %343 = vmatpush.msra.mxu0 0.0
        %344 = vmatpush.msra.mxu0 0.0
        %345 = vmatpush.msra.mxu0 0.0
        %346 = vmatpush.msra.mxu0 %v200
        %347 = vmatmul.f32.gmra.mxu0 %v284
        %v348 = vpop.f32.mrf.mxu0
        %v349 = vadd.f32 %v205, %v348
        %350 = vmatmul.f32.gmra.mxu0 %v287
        %v351 = vpop.f32.mrf.mxu0
        %v352 = vadd.f32 %v210, %v351
        %353 = vmatmul.f32.gmra.mxu0 %v290
        %v354 = vpop.f32.mrf.mxu0
        %v355 = vadd.f32 %v215, %v354
        %356 = vmatmul.f32.gmra.mxu0 %v293
        %v357 = vpop.f32.mrf.mxu0
        %v358 = vadd.f32 %v220, %v357
        %359 = vmatmul.f32.gmra.mxu0 %v296
        %v360 = vpop.f32.mrf.mxu0
        %v361 = vadd.f32 %v225, %v360
        %362 = vmatmul.f32.gmra.mxu0 %v299
        %v363 = vpop.f32.mrf.mxu0
        %v364 = vadd.f32 %v230, %v363
        %365 = vmatmul.f32.gmra.mxu0 %v302
        %v366 = vpop.f32.mrf.mxu0
        %v367 = vadd.f32 %v235, %v366
        %368 = vmatmul.f32.gmra.mxu0 %v305
        %v369 = vpop.f32.mrf.mxu0
        %v370 = vadd.f32 %v240, %v369
        %371 = vmatmul.f32.gmra.mxu0 %v308
        %v372 = vpop.f32.mrf.mxu0
        %v373 = vadd.f32 %v245, %v372
        %374 = vmatmul.f32.gmra.mxu0 %v311
        %v375 = vpop.f32.mrf.mxu0
        %v376 = vadd.f32 %v250, %v375
        %377 = vmatmul.f32.gmra.mxu0 %v314
        %v378 = vpop.f32.mrf.mxu0
        %v379 = vadd.f32 %v255, %v378
        %380 = vmatmul.f32.gmra.mxu0 %v317
        %v381 = vpop.f32.mrf.mxu0
        %v382 = vadd.f32 %v260, %v381
        %383 = vmatmul.f32.gmra.mxu0 %v320
        %v384 = vpop.f32.mrf.mxu0
        %v385 = vadd.f32 %v265, %v384
        %386 = vmatmul.f32.gmra.mxu0 %v323
        %v387 = vpop.f32.mrf.mxu0
        %v388 = vadd.f32 %v270, %v387
        %389 = vmatmul.f32.gmra.mxu0 %v326
        %v390 = vpop.f32.mrf.mxu0
        %v391 = vadd.f32 %v275, %v390
        %392 = vmatmul.f32.gmra.mxu0 %v329
        %v393 = vpop.f32.mrf.mxu0
        %v394 = vadd.f32 %v280, %v393
        %395 = vdwg.mxu0
        %396 = vmatpush.msra.mxu0 0.0
        %397 = vmatpush.msra.mxu0 0.0
        %398 = vmatpush.msra.mxu0 0.0
        %399 = vmatpush.msra.mxu0 0.0
        %400 = vmatpush.msra.mxu0 0.0
        %401 = vmatpush.msra.mxu0 0.0
        %402 = vmatpush.msra.mxu0 0.0
        %403 = vmatpush.msra.mxu0 0.0
        %404 = vmatpush.msra.mxu0 0.0
        %405 = vmatpush.msra.mxu0 0.0
        %406 = vmatpush.msra.mxu0 0.0
        %407 = vmatpush.msra.mxu0 0.0
        %408 = vmatpush.msra.mxu0 0.0
        %409 = vmatpush.msra.mxu0 0.0
        %410 = vmatpush.msra.mxu0 0.0
        %411 = vmatpush.msra.mxu0 %v201
        %412 = vmatmul.f32.gmra.mxu0 %v284
        %v413 = vpop.f32.mrf.mxu0
        %v414 = vadd.f32 %v205, %v413
        %415 = vmatmul.f32.gmra.mxu0 %v287
        %v416 = vpop.f32.mrf.mxu0
        %v417 = vadd.f32 %v210, %v416
        %418 = vmatmul.f32.gmra.mxu0 %v290
        %v419 = vpop.f32.mrf.mxu0
        %v420 = vadd.f32 %v215, %v419
        %421 = vmatmul.f32.gmra.mxu0 %v293
        %v422 = vpop.f32.mrf.mxu0
        %v423 = vadd.f32 %v220, %v422
        %424 = vmatmul.f32.gmra.mxu0 %v296
        %v425 = vpop.f32.mrf.mxu0
        %v426 = vadd.f32 %v225, %v425
        %427 = vmatmul.f32.gmra.mxu0 %v299
        %v428 = vpop.f32.mrf.mxu0
        %v429 = vadd.f32 %v230, %v428
        %430 = vmatmul.f32.gmra.mxu0 %v302
        %v431 = vpop.f32.mrf.mxu0
        %v432 = vadd.f32 %v235, %v431
        %433 = vmatmul.f32.gmra.mxu0 %v305
        %v434 = vpop.f32.mrf.mxu0
        %v435 = vadd.f32 %v240, %v434
        %436 = vmatmul.f32.gmra.mxu0 %v308
        %v437 = vpop.f32.mrf.mxu0
        %v438 = vadd.f32 %v245, %v437
        %439 = vmatmul.f32.gmra.mxu0 %v311
        %v440 = vpop.f32.mrf.mxu0
        %v441 = vadd.f32 %v250, %v440
        %442 = vmatmul.f32.gmra.mxu0 %v314
        %v443 = vpop.f32.mrf.mxu0
        %v444 = vadd.f32 %v255, %v443
        %445 = vmatmul.f32.gmra.mxu0 %v317
        %v446 = vpop.f32.mrf.mxu0
        %v447 = vadd.f32 %v260, %v446
        %448 = vmatmul.f32.gmra.mxu0 %v320
        %v449 = vpop.f32.mrf.mxu0
        %v450 = vadd.f32 %v265, %v449
        %451 = vmatmul.f32.gmra.mxu0 %v323
        %v452 = vpop.f32.mrf.mxu0
        %v453 = vadd.f32 %v270, %v452
        %454 = vmatmul.f32.gmra.mxu0 %v326
        %v455 = vpop.f32.mrf.mxu0
        %v456 = vadd.f32 %v275, %v455
        %457 = vmatmul.f32.gmra.mxu0 %v329
        %v458 = vpop.f32.mrf.mxu0
        %v459 = vadd.f32 %v280, %v458
        %460 = vdwg.mxu0
        %vm461 = vcmp.ge.f32.partialorder %v349, 0.0
        %vm462 = vcmp.ge.f32.partialorder %v414, 0.0
        %vm463 = vcmp.ge.f32.partialorder %v352, 0.0
        %vm464 = vcmp.ge.f32.partialorder %v417, 0.0
        %vm465 = vcmp.ge.f32.partialorder %v355, 0.0
        %vm466 = vcmp.ge.f32.partialorder %v420, 0.0
        %vm467 = vcmp.ge.f32.partialorder %v358, 0.0
        %vm468 = vcmp.ge.f32.partialorder %v423, 0.0
        %vm469 = vcmp.ge.f32.partialorder %v361, 0.0
        %vm470 = vcmp.ge.f32.partialorder %v426, 0.0
        %vm471 = vcmp.ge.f32.partialorder %v364, 0.0
        %vm472 = vcmp.ge.f32.partialorder %v429, 0.0
        %vm473 = vcmp.ge.f32.partialorder %v367, 0.0
        %vm474 = vcmp.ge.f32.partialorder %v432, 0.0
        %vm475 = vcmp.ge.f32.partialorder %v370, 0.0
        %vm476 = vcmp.ge.f32.partialorder %v435, 0.0
        %vm477 = vcmp.ge.f32.partialorder %v373, 0.0
        %vm478 = vcmp.ge.f32.partialorder %v438, 0.0
        %vm479 = vcmp.ge.f32.partialorder %v376, 0.0
        %vm480 = vcmp.ge.f32.partialorder %v441, 0.0
        %vm481 = vcmp.ge.f32.partialorder %v379, 0.0
        %vm482 = vcmp.ge.f32.partialorder %v444, 0.0
        %vm483 = vcmp.ge.f32.partialorder %v382, 0.0
        %vm484 = vcmp.ge.f32.partialorder %v447, 0.0
        %vm485 = vcmp.ge.f32.partialorder %v385, 0.0
        %vm486 = vcmp.ge.f32.partialorder %v450, 0.0
        %vm487 = vcmp.ge.f32.partialorder %v388, 0.0
        %vm488 = vcmp.ge.f32.partialorder %v453, 0.0
        %vm489 = vcmp.ge.f32.partialorder %v391, 0.0
        %vm490 = vcmp.ge.f32.partialorder %v456, 0.0
        %vm491 = vcmp.ge.f32.partialorder %v394, 0.0
        %vm492 = vcmp.ge.f32.partialorder %v459, 0.0
        %493 = vset.pattern.permute.xlu0 1
        %494 = vperm.xlu0 %493, %v184
        %v495 = vpop.permute.xlu0 %494
        %497 = vset.pattern.permute.xlu0 1
        %498 = vperm.xlu0 %497, %v185
        %v499 = vpop.permute.xlu0 %498
        %501 = vset.pattern.permute.xlu0 1
        %502 = vperm.xlu0 %501, %v186
        %v503 = vpop.permute.xlu0 %502
        %505 = vset.pattern.permute.xlu0 1
        %506 = vperm.xlu0 %505, %v187
        %v507 = vpop.permute.xlu0 %506
        %509 = vset.pattern.permute.xlu0 1
        %510 = vperm.xlu0 %509, %v188
        %v511 = vpop.permute.xlu0 %510
        %513 = vset.pattern.permute.xlu0 1
        %514 = vperm.xlu0 %513, %v189
        %v515 = vpop.permute.xlu0 %514
        %517 = vset.pattern.permute.xlu0 1
        %518 = vperm.xlu0 %517, %v190
        %v519 = vpop.permute.xlu0 %518
        %521 = vset.pattern.permute.xlu0 1
        %522 = vperm.xlu0 %521, %v191
        %v523 = vpop.permute.xlu0 %522
        %525 = vset.pattern.permute.xlu0 1
        %526 = vperm.xlu0 %525, %v192
        %v527 = vpop.permute.xlu0 %526
        %529 = vset.pattern.permute.xlu0 1
        %530 = vperm.xlu0 %529, %v193
        %v531 = vpop.permute.xlu0 %530
        %533 = vset.pattern.permute.xlu0 1
        %534 = vperm.xlu0 %533, %v194
        %v535 = vpop.permute.xlu0 %534
        %537 = vset.pattern.permute.xlu0 1
        %538 = vperm.xlu0 %537, %v195
        %v539 = vpop.permute.xlu0 %538
        %541 = vset.pattern.permute.xlu0 1
        %542 = vperm.xlu0 %541, %v196
        %v543 = vpop.permute.xlu0 %542
        %545 = vset.pattern.permute.xlu0 1
        %546 = vperm.xlu0 %545, %v197
        %v547 = vpop.permute.xlu0 %546
        %549 = vset.pattern.permute.xlu0 1
        %550 = vperm.xlu0 %549, %v198
        %v551 = vpop.permute.xlu0 %550
        %553 = vset.pattern.permute.xlu0 1
        %554 = vperm.xlu0 %553, %v199
        %v555 = vpop.permute.xlu0 %554
        %v557 = vmul.f32 %v495, %v349
        %v558 = vmul.f32 %v495, %v414
        %v559 = vmul.f32 %v499, %v352
        %v560 = vmul.f32 %v499, %v417
        %v561 = vmul.f32 %v503, %v355
        %v562 = vmul.f32 %v503, %v420
        %v563 = vmul.f32 %v507, %v358
        %v564 = vmul.f32 %v507, %v423
        %v565 = vmul.f32 %v511, %v361
        %v566 = vmul.f32 %v511, %v426
        %v567 = vmul.f32 %v515, %v364
        %v568 = vmul.f32 %v515, %v429
        %v569 = vmul.f32 %v519, %v367
        %v570 = vmul.f32 %v519, %v432
        %v571 = vmul.f32 %v523, %v370
        %v572 = vmul.f32 %v523, %v435
        %v573 = vmul.f32 %v527, %v373
        %v574 = vmul.f32 %v527, %v438
        %v575 = vmul.f32 %v531, %v376
        %v576 = vmul.f32 %v531, %v441
        %v577 = vmul.f32 %v535, %v379
        %v578 = vmul.f32 %v535, %v444
        %v579 = vmul.f32 %v539, %v382
        %v580 = vmul.f32 %v539, %v447
        %v581 = vmul.f32 %v543, %v385
        %v582 = vmul.f32 %v543, %v450
        %v583 = vmul.f32 %v547, %v388
        %v584 = vmul.f32 %v547, %v453
        %v585 = vmul.f32 %v551, %v391
        %v586 = vmul.f32 %v551, %v456
        %v587 = vmul.f32 %v555, %v394
        %v588 = vmul.f32 %v555, %v459
        %v589 = vsel %vm461, %v349, %v557
        %v590 = vsel %vm462, %v414, %v558
        %v591 = vsel %vm463, %v352, %v559
        %v592 = vsel %vm464, %v417, %v560
        %v593 = vsel %vm465, %v355, %v561
        %v594 = vsel %vm466, %v420, %v562
        %v595 = vsel %vm467, %v358, %v563
        %v596 = vsel %vm468, %v423, %v564
        %v597 = vsel %vm469, %v361, %v565
        %v598 = vsel %vm470, %v426, %v566
        %v599 = vsel %vm471, %v364, %v567
        %v600 = vsel %vm472, %v429, %v568
        %v601 = vsel %vm473, %v367, %v569
        %v602 = vsel %vm474, %v432, %v570
        %v603 = vsel %vm475, %v370, %v571
        %v604 = vsel %vm476, %v435, %v572
        %v605 = vsel %vm477, %v373, %v573
        %v606 = vsel %vm478, %v438, %v574
        %v607 = vsel %vm479, %v376, %v575
        %v608 = vsel %vm480, %v441, %v576
        %v609 = vsel %vm481, %v379, %v577
        %v610 = vsel %vm482, %v444, %v578
        %v611 = vsel %vm483, %v382, %v579
        %v612 = vsel %vm484, %v447, %v580
        %v613 = vsel %vm485, %v385, %v581
        %v614 = vsel %vm486, %v450, %v582
        %v615 = vsel %vm487, %v388, %v583
        %v616 = vsel %vm488, %v453, %v584
        %v617 = vsel %vm489, %v391, %v585
        %v618 = vsel %vm490, %v456, %v586
        %v619 = vsel %vm491, %v394, %v587
        %v620 = vsel %vm492, %v459, %v588
        %621 = vst [vmem:[%s160] sm:$0xff] %v589
        %622 = vst [vmem:[%s160 + $0x8] sm:$0xff] %v590
        %623 = vst [vmem:[%s160 + $0x20] sm:$0xff] %v591
        %624 = vst [vmem:[%s160 + $0x28] sm:$0xff] %v592
        %625 = vst [vmem:[%s160 + $0x40] sm:$0xff] %v593
        %626 = vst [vmem:[%s160 + $0x48] sm:$0xff] %v594
        %627 = vst [vmem:[%s160 + $0x60] sm:$0xff] %v595
        %628 = vst [vmem:[%s160 + $0x68] sm:$0xff] %v596
        %629 = vst [vmem:[%s160 + $0x80] sm:$0xff] %v597
        %630 = vst [vmem:[%s160 + $0x88] sm:$0xff] %v598
        %631 = vst [vmem:[%s160 + $0xa0] sm:$0xff] %v599
        %632 = vst [vmem:[%s160 + $0xa8] sm:$0xff] %v600
        %633 = vst [vmem:[%s160 + $0xc0] sm:$0xff] %v601
        %634 = vst [vmem:[%s160 + $0xc8] sm:$0xff] %v602
        %635 = vst [vmem:[%s160 + $0xe0] sm:$0xff] %v603
        %636 = vst [vmem:[%s160 + $0xe8] sm:$0xff] %v604
        %637 = vst [vmem:[%s160 + $0x100] sm:$0xff] %v605
        %638 = vst [vmem:[%s160 + $0x108] sm:$0xff] %v606
        %639 = vst [vmem:[%s160 + $0x120] sm:$0xff] %v607
        %640 = vst [vmem:[%s160 + $0x128] sm:$0xff] %v608
        %641 = vst [vmem:[%s160 + $0x140] sm:$0xff] %v609
        %642 = vst [vmem:[%s160 + $0x148] sm:$0xff] %v610
        %643 = vst [vmem:[%s160 + $0x160] sm:$0xff] %v611
        %644 = vst [vmem:[%s160 + $0x168] sm:$0xff] %v612
        %645 = vst [vmem:[%s160 + $0x180] sm:$0xff] %v613
        %646 = vst [vmem:[%s160 + $0x188] sm:$0xff] %v614
        %647 = vst [vmem:[%s160 + $0x1a0] sm:$0xff] %v615
        %648 = vst [vmem:[%s160 + $0x1a8] sm:$0xff] %v616
        %649 = vst [vmem:[%s160 + $0x1c0] sm:$0xff] %v617
        %650 = vst [vmem:[%s160 + $0x1c8] sm:$0xff] %v618
        %651 = vst [vmem:[%s160 + $0x1e0] sm:$0xff] %v619
        %652 = vst [vmem:[%s160 + $0x1e8] sm:$0xff] %v620
        %s653 = scalar_lea.vmem %s165, 16
        %v654 = vld [vmem:[%s653] sm:$0xff]
        %v655 = vld [vmem:[%s653 + $0x8] sm:$0xff]
        %656 = vmatpush.msra.mxu0 0.0
        %657 = vmatpush.msra.mxu0 0.0
        %658 = vmatpush.msra.mxu0 0.0
        %659 = vmatpush.msra.mxu0 0.0
        %660 = vmatpush.msra.mxu0 0.0
        %661 = vmatpush.msra.mxu0 0.0
        %662 = vmatpush.msra.mxu0 0.0
        %663 = vmatpush.msra.mxu0 0.0
        %664 = vmatpush.msra.mxu0 0.0
        %665 = vmatpush.msra.mxu0 0.0
        %666 = vmatpush.msra.mxu0 0.0
        %667 = vmatpush.msra.mxu0 0.0
        %668 = vmatpush.msra.mxu0 0.0
        %669 = vmatpush.msra.mxu0 0.0
        %670 = vmatpush.msra.mxu0 0.0
        %671 = vmatpush.msra.mxu0 %v654
        %672 = vmatmul.f32.gmra.mxu0 %v284
        %v673 = vpop.f32.mrf.mxu0
        %v674 = vadd.f32 %v205, %v673
        %675 = vmatmul.f32.gmra.mxu0 %v287
        %v676 = vpop.f32.mrf.mxu0
        %v677 = vadd.f32 %v210, %v676
        %678 = vmatmul.f32.gmra.mxu0 %v290
        %v679 = vpop.f32.mrf.mxu0
        %v680 = vadd.f32 %v215, %v679
        %681 = vmatmul.f32.gmra.mxu0 %v293
        %v682 = vpop.f32.mrf.mxu0
        %v683 = vadd.f32 %v220, %v682
        %684 = vmatmul.f32.gmra.mxu0 %v296
        %v685 = vpop.f32.mrf.mxu0
        %v686 = vadd.f32 %v225, %v685
        %687 = vmatmul.f32.gmra.mxu0 %v299
        %v688 = vpop.f32.mrf.mxu0
        %v689 = vadd.f32 %v230, %v688
        %690 = vmatmul.f32.gmra.mxu0 %v302
        %v691 = vpop.f32.mrf.mxu0
        %v692 = vadd.f32 %v235, %v691
        %693 = vmatmul.f32.gmra.mxu0 %v305
        %v694 = vpop.f32.mrf.mxu0
        %v695 = vadd.f32 %v240, %v694
        %696 = vmatmul.f32.gmra.mxu0 %v308
        %v697 = vpop.f32.mrf.mxu0
        %v698 = vadd.f32 %v245, %v697
        %699 = vmatmul.f32.gmra.mxu0 %v311
        %v700 = vpop.f32.mrf.mxu0
        %v701 = vadd.f32 %v250, %v700
        %702 = vmatmul.f32.gmra.mxu0 %v314
        %v703 = vpop.f32.mrf.mxu0
        %v704 = vadd.f32 %v255, %v703
        %705 = vmatmul.f32.gmra.mxu0 %v317
        %v706 = vpop.f32.mrf.mxu0
        %v707 = vadd.f32 %v260, %v706
        %708 = vmatmul.f32.gmra.mxu0 %v320
        %v709 = vpop.f32.mrf.mxu0
        %v710 = vadd.f32 %v265, %v709
        %711 = vmatmul.f32.gmra.mxu0 %v323
        %v712 = vpop.f32.mrf.mxu0
        %v713 = vadd.f32 %v270, %v712
        %714 = vmatmul.f32.gmra.mxu0 %v326
        %v715 = vpop.f32.mrf.mxu0
        %v716 = vadd.f32 %v275, %v715
        %717 = vmatmul.f32.gmra.mxu0 %v329
        %v718 = vpop.f32.mrf.mxu0
        %v719 = vadd.f32 %v280, %v718
        %720 = vdwg.mxu0
        %721 = vmatpush.msra.mxu0 0.0
        %722 = vmatpush.msra.mxu0 0.0
        %723 = vmatpush.msra.mxu0 0.0
        %724 = vmatpush.msra.mxu0 0.0
        %725 = vmatpush.msra.mxu0 0.0
        %726 = vmatpush.msra.mxu0 0.0
        %727 = vmatpush.msra.mxu0 0.0
        %728 = vmatpush.msra.mxu0 0.0
        %729 = vmatpush.msra.mxu0 0.0
        %730 = vmatpush.msra.mxu0 0.0
        %731 = vmatpush.msra.mxu0 0.0
        %732 = vmatpush.msra.mxu0 0.0
        %733 = vmatpush.msra.mxu0 0.0
        %734 = vmatpush.msra.mxu0 0.0
        %735 = vmatpush.msra.mxu0 0.0
        %736 = vmatpush.msra.mxu0 %v655
        %737 = vmatmul.f32.gmra.mxu0 %v284
        %v738 = vpop.f32.mrf.mxu0
        %v739 = vadd.f32 %v205, %v738
        %740 = vmatmul.f32.gmra.mxu0 %v287
        %v741 = vpop.f32.mrf.mxu0
        %v742 = vadd.f32 %v210, %v741
        %743 = vmatmul.f32.gmra.mxu0 %v290
        %v744 = vpop.f32.mrf.mxu0
        %v745 = vadd.f32 %v215, %v744
        %746 = vmatmul.f32.gmra.mxu0 %v293
        %v747 = vpop.f32.mrf.mxu0
        %v748 = vadd.f32 %v220, %v747
        %749 = vmatmul.f32.gmra.mxu0 %v296
        %v750 = vpop.f32.mrf.mxu0
        %v751 = vadd.f32 %v225, %v750
        %752 = vmatmul.f32.gmra.mxu0 %v299
        %v753 = vpop.f32.mrf.mxu0
        %v754 = vadd.f32 %v230, %v753
        %755 = vmatmul.f32.gmra.mxu0 %v302
        %v756 = vpop.f32.mrf.mxu0
        %v757 = vadd.f32 %v235, %v756
        %758 = vmatmul.f32.gmra.mxu0 %v305
        %v759 = vpop.f32.mrf.mxu0
        %v760 = vadd.f32 %v240, %v759
        %761 = vmatmul.f32.gmra.mxu0 %v308
        %v762 = vpop.f32.mrf.mxu0
        %v763 = vadd.f32 %v245, %v762
        %764 = vmatmul.f32.gmra.mxu0 %v311
        %v765 = vpop.f32.mrf.mxu0
        %v766 = vadd.f32 %v250, %v765
        %767 = vmatmul.f32.gmra.mxu0 %v314
        %v768 = vpop.f32.mrf.mxu0
        %v769 = vadd.f32 %v255, %v768
        %770 = vmatmul.f32.gmra.mxu0 %v317
        %v771 = vpop.f32.mrf.mxu0
        %v772 = vadd.f32 %v260, %v771
        %773 = vmatmul.f32.gmra.mxu0 %v320
        %v774 = vpop.f32.mrf.mxu0
        %v775 = vadd.f32 %v265, %v774
        %776 = vmatmul.f32.gmra.mxu0 %v323
        %v777 = vpop.f32.mrf.mxu0
        %v778 = vadd.f32 %v270, %v777
        %779 = vmatmul.f32.gmra.mxu0 %v326
        %v780 = vpop.f32.mrf.mxu0
        %v781 = vadd.f32 %v275, %v780
        %782 = vmatmul.f32.gmra.mxu0 %v329
        %v783 = vpop.f32.mrf.mxu0
        %v784 = vadd.f32 %v280, %v783
        %785 = vdwg.mxu0
        %vm786 = vcmp.ge.f32.partialorder %v674, 0.0
        %vm787 = vcmp.ge.f32.partialorder %v739, 0.0
        %vm788 = vcmp.ge.f32.partialorder %v677, 0.0
        %vm789 = vcmp.ge.f32.partialorder %v742, 0.0
        %vm790 = vcmp.ge.f32.partialorder %v680, 0.0
        %vm791 = vcmp.ge.f32.partialorder %v745, 0.0
        %vm792 = vcmp.ge.f32.partialorder %v683, 0.0
        %vm793 = vcmp.ge.f32.partialorder %v748, 0.0
        %vm794 = vcmp.ge.f32.partialorder %v686, 0.0
        %vm795 = vcmp.ge.f32.partialorder %v751, 0.0
        %vm796 = vcmp.ge.f32.partialorder %v689, 0.0
        %vm797 = vcmp.ge.f32.partialorder %v754, 0.0
        %vm798 = vcmp.ge.f32.partialorder %v692, 0.0
        %vm799 = vcmp.ge.f32.partialorder %v757, 0.0
        %vm800 = vcmp.ge.f32.partialorder %v695, 0.0
        %vm801 = vcmp.ge.f32.partialorder %v760, 0.0
        %vm802 = vcmp.ge.f32.partialorder %v698, 0.0
        %vm803 = vcmp.ge.f32.partialorder %v763, 0.0
        %vm804 = vcmp.ge.f32.partialorder %v701, 0.0
        %vm805 = vcmp.ge.f32.partialorder %v766, 0.0
        %vm806 = vcmp.ge.f32.partialorder %v704, 0.0
        %vm807 = vcmp.ge.f32.partialorder %v769, 0.0
        %vm808 = vcmp.ge.f32.partialorder %v707, 0.0
        %vm809 = vcmp.ge.f32.partialorder %v772, 0.0
        %vm810 = vcmp.ge.f32.partialorder %v710, 0.0
        %vm811 = vcmp.ge.f32.partialorder %v775, 0.0
        %vm812 = vcmp.ge.f32.partialorder %v713, 0.0
        %vm813 = vcmp.ge.f32.partialorder %v778, 0.0
        %vm814 = vcmp.ge.f32.partialorder %v716, 0.0
        %vm815 = vcmp.ge.f32.partialorder %v781, 0.0
        %vm816 = vcmp.ge.f32.partialorder %v719, 0.0
        %vm817 = vcmp.ge.f32.partialorder %v784, 0.0
        %v818 = vmul.f32 %v495, %v674
        %v819 = vmul.f32 %v495, %v739
        %v820 = vmul.f32 %v499, %v677
        %v821 = vmul.f32 %v499, %v742
        %v822 = vmul.f32 %v503, %v680
        %v823 = vmul.f32 %v503, %v745
        %v824 = vmul.f32 %v507, %v683
        %v825 = vmul.f32 %v507, %v748
        %v826 = vmul.f32 %v511, %v686
        %v827 = vmul.f32 %v511, %v751
        %v828 = vmul.f32 %v515, %v689
        %v829 = vmul.f32 %v515, %v754
        %v830 = vmul.f32 %v519, %v692
        %v831 = vmul.f32 %v519, %v757
        %v832 = vmul.f32 %v523, %v695
        %v833 = vmul.f32 %v523, %v760
        %v834 = vmul.f32 %v527, %v698
        %v835 = vmul.f32 %v527, %v763
        %v836 = vmul.f32 %v531, %v701
        %v837 = vmul.f32 %v531, %v766
        %v838 = vmul.f32 %v535, %v704
        %v839 = vmul.f32 %v535, %v769
        %v840 = vmul.f32 %v539, %v707
        %v841 = vmul.f32 %v539, %v772
        %v842 = vmul.f32 %v543, %v710
        %v843 = vmul.f32 %v543, %v775
        %v844 = vmul.f32 %v547, %v713
        %v845 = vmul.f32 %v547, %v778
        %v846 = vmul.f32 %v551, %v716
        %v847 = vmul.f32 %v551, %v781
        %v848 = vmul.f32 %v555, %v719
        %v849 = vmul.f32 %v555, %v784
        %v850 = vsel %vm786, %v674, %v818
        %v851 = vsel %vm787, %v739, %v819
        %v852 = vsel %vm788, %v677, %v820
        %v853 = vsel %vm789, %v742, %v821
        %v854 = vsel %vm790, %v680, %v822
        %v855 = vsel %vm791, %v745, %v823
        %v856 = vsel %vm792, %v683, %v824
        %v857 = vsel %vm793, %v748, %v825
        %v858 = vsel %vm794, %v686, %v826
        %v859 = vsel %vm795, %v751, %v827
        %v860 = vsel %vm796, %v689, %v828
        %v861 = vsel %vm797, %v754, %v829
        %v862 = vsel %vm798, %v692, %v830
        %v863 = vsel %vm799, %v757, %v831
        %v864 = vsel %vm800, %v695, %v832
        %v865 = vsel %vm801, %v760, %v833
        %v866 = vsel %vm802, %v698, %v834
        %v867 = vsel %vm803, %v763, %v835
        %v868 = vsel %vm804, %v701, %v836
        %v869 = vsel %vm805, %v766, %v837
        %v870 = vsel %vm806, %v704, %v838
        %v871 = vsel %vm807, %v769, %v839
        %v872 = vsel %vm808, %v707, %v840
        %v873 = vsel %vm809, %v772, %v841
        %v874 = vsel %vm810, %v710, %v842
        %v875 = vsel %vm811, %v775, %v843
        %v876 = vsel %vm812, %v713, %v844
        %v877 = vsel %vm813, %v778, %v845
        %v878 = vsel %vm814, %v716, %v846
        %v879 = vsel %vm815, %v781, %v847
        %v880 = vsel %vm816, %v719, %v848
        %v881 = vsel %vm817, %v784, %v849
        %s882 = scalar_lea.vmem %s160, 16 [#allocation2]
        %883 = vst [vmem:[%s882] sm:$0xff] %v850
        %884 = vst [vmem:[%s882 + $0x8] sm:$0xff] %v851
        %885 = vst [vmem:[%s882 + $0x20] sm:$0xff] %v852
        %886 = vst [vmem:[%s882 + $0x28] sm:$0xff] %v853
        %887 = vst [vmem:[%s882 + $0x40] sm:$0xff] %v854
        %888 = vst [vmem:[%s882 + $0x48] sm:$0xff] %v855
        %889 = vst [vmem:[%s882 + $0x60] sm:$0xff] %v856
        %890 = vst [vmem:[%s882 + $0x68] sm:$0xff] %v857
        %891 = vst [vmem:[%s882 + $0x80] sm:$0xff] %v858
        %892 = vst [vmem:[%s882 + $0x88] sm:$0xff] %v859
        %893 = vst [vmem:[%s882 + $0xa0] sm:$0xff] %v860
        %894 = vst [vmem:[%s882 + $0xa8] sm:$0xff] %v861
        %895 = vst [vmem:[%s882 + $0xc0] sm:$0xff] %v862
        %896 = vst [vmem:[%s882 + $0xc8] sm:$0xff] %v863
        %897 = vst [vmem:[%s882 + $0xe0] sm:$0xff] %v864
        %898 = vst [vmem:[%s882 + $0xe8] sm:$0xff] %v865
        %899 = vst [vmem:[%s882 + $0x100] sm:$0xff] %v866
        %900 = vst [vmem:[%s882 + $0x108] sm:$0xff] %v867
        %901 = vst [vmem:[%s882 + $0x120] sm:$0xff] %v868
        %902 = vst [vmem:[%s882 + $0x128] sm:$0xff] %v869
        %903 = vst [vmem:[%s882 + $0x140] sm:$0xff] %v870
        %904 = vst [vmem:[%s882 + $0x148] sm:$0xff] %v871
        %905 = vst [vmem:[%s882 + $0x160] sm:$0xff] %v872
        %906 = vst [vmem:[%s882 + $0x168] sm:$0xff] %v873
        %907 = vst [vmem:[%s882 + $0x180] sm:$0xff] %v874
        %908 = vst [vmem:[%s882 + $0x188] sm:$0xff] %v875
        %909 = vst [vmem:[%s882 + $0x1a0] sm:$0xff] %v876
        %910 = vst [vmem:[%s882 + $0x1a8] sm:$0xff] %v877
        %911 = vst [vmem:[%s882 + $0x1c0] sm:$0xff] %v878
        %912 = vst [vmem:[%s882 + $0x1c8] sm:$0xff] %v879
        %913 = vst [vmem:[%s882 + $0x1e0] sm:$0xff] %v880
        %914 = vst [vmem:[%s882 + $0x1e8] sm:$0xff] %v881
        %s915 = sand.u32 %s90, 1
        %s916 = sand.u32 %s90, 1
        %s917 = smul.addr %s916, 512
        %s918 = scalar_lea.vmem [#allocation2], %s917
        // Predicated region
        $region33: #{up_conv_forward.3} parent=31 // pred_check
          %p919 = pneg %p100
        $region34: #{up_conv_forward.3} parent=31 // pred_check_branch
          %921 = sbr.rel (%p919) target = $region36
        $region35: #{up_conv_forward.3} parent=31 // pred_region
          %s922 = smul.u32 4, %s14
          %s923 = smul.addr %s922, 8
          %s924 = scalar_lea.vmem %s3, %s923
          // Predicated region
          $region37: #{up_conv_forward.3} parent=35 // pred_check
            _
          $region38: #{up_conv_forward.3} parent=35 // pred_check_branch
            %926 = sbr.rel (0) target = $region40
          $region39: #{up_conv_forward.3} parent=35 // pred_region
            // Predicated region
            $region41: #{up_conv_forward.3} parent=39 // pred_check
              _
            $region42: #{up_conv_forward.3} parent=39 // pred_check_branch
              %928 = sbr.rel (0) target = $region44
            $region43: #{up_conv_forward.3} parent=39 // pred_region
              loop: start=0, step=1, limit=1
              $region45: #{up_conv_forward.3} parent=43 // loop_pre_header
                _
              $region46: #{up_conv_forward.3} parent=43 // loop_header
                %s930 = sphi 0, %s934
                %p931 = scmp.ge.s32.totalorder %s930, 1
                %s935 = sphi %s918, %s918
                %s936 = sphi %s924, %s924
              $region47: #{up_conv_forward.3} parent=43 // loop_header_branch
                %933 = sbr.rel (%p931) target = $region51
              $region48: #{up_conv_forward.3} parent=43 // loop_body
                %v937 = vld [vmem:[%s935] sm:$0xff]
                %938 = vst [vmem:[%s936] sm:$0xff] %v937
                %v939 = vld [vmem:[%s935 + $0x8] sm:$0xff]
                %940 = vst [vmem:[%s936 + $0x8] sm:$0xff] %v939
                %v941 = vld [vmem:[%s935 + $0x10] sm:$0xff]
                %942 = vst [vmem:[%s936 + $0x10] sm:$0xff] %v941
                %v943 = vld [vmem:[%s935 + $0x18] sm:$0xff]
                %944 = vst [vmem:[%s936 + $0x18] sm:$0xff] %v943
                %v945 = vld [vmem:[%s935 + $0x20] sm:$0xff]
                %946 = vst [vmem:[%s936 + $0x40] sm:$0xff] %v945
                %v947 = vld [vmem:[%s935 + $0x28] sm:$0xff]
                %948 = vst [vmem:[%s936 + $0x48] sm:$0xff] %v947
                %v949 = vld [vmem:[%s935 + $0x30] sm:$0xff]
                %950 = vst [vmem:[%s936 + $0x50] sm:$0xff] %v949
                %v951 = vld [vmem:[%s935 + $0x38] sm:$0xff]
                %952 = vst [vmem:[%s936 + $0x58] sm:$0xff] %v951
                %v953 = vld [vmem:[%s935 + $0x40] sm:$0xff]
                %954 = vst [vmem:[%s936 + $0x80] sm:$0xff] %v953
                %v955 = vld [vmem:[%s935 + $0x48] sm:$0xff]
                %956 = vst [vmem:[%s936 + $0x88] sm:$0xff] %v955
                %v957 = vld [vmem:[%s935 + $0x50] sm:$0xff]
                %958 = vst [vmem:[%s936 + $0x90] sm:$0xff] %v957
                %v959 = vld [vmem:[%s935 + $0x58] sm:$0xff]
                %960 = vst [vmem:[%s936 + $0x98] sm:$0xff] %v959
                %v961 = vld [vmem:[%s935 + $0x60] sm:$0xff]
                %962 = vst [vmem:[%s936 + $0xc0] sm:$0xff] %v961
                %v963 = vld [vmem:[%s935 + $0x68] sm:$0xff]
                %964 = vst [vmem:[%s936 + $0xc8] sm:$0xff] %v963
                %v965 = vld [vmem:[%s935 + $0x70] sm:$0xff]
                %966 = vst [vmem:[%s936 + $0xd0] sm:$0xff] %v965
                %v967 = vld [vmem:[%s935 + $0x78] sm:$0xff]
                %968 = vst [vmem:[%s936 + $0xd8] sm:$0xff] %v967
                %v969 = vld [vmem:[%s935 + $0x80] sm:$0xff]
                %970 = vst [vmem:[%s936 + $0x100] sm:$0xff] %v969
                %v971 = vld [vmem:[%s935 + $0x88] sm:$0xff]
                %972 = vst [vmem:[%s936 + $0x108] sm:$0xff] %v971
                %v973 = vld [vmem:[%s935 + $0x90] sm:$0xff]
                %974 = vst [vmem:[%s936 + $0x110] sm:$0xff] %v973
                %v975 = vld [vmem:[%s935 + $0x98] sm:$0xff]
                %976 = vst [vmem:[%s936 + $0x118] sm:$0xff] %v975
                %v977 = vld [vmem:[%s935 + $0xa0] sm:$0xff]
                %978 = vst [vmem:[%s936 + $0x140] sm:$0xff] %v977
                %v979 = vld [vmem:[%s935 + $0xa8] sm:$0xff]
                %980 = vst [vmem:[%s936 + $0x148] sm:$0xff] %v979
                %v981 = vld [vmem:[%s935 + $0xb0] sm:$0xff]
                %982 = vst [vmem:[%s936 + $0x150] sm:$0xff] %v981
                %v983 = vld [vmem:[%s935 + $0xb8] sm:$0xff]
                %984 = vst [vmem:[%s936 + $0x158] sm:$0xff] %v983
                %v985 = vld [vmem:[%s935 + $0xc0] sm:$0xff]
                %986 = vst [vmem:[%s936 + $0x180] sm:$0xff] %v985
                %v987 = vld [vmem:[%s935 + $0xc8] sm:$0xff]
                %988 = vst [vmem:[%s936 + $0x188] sm:$0xff] %v987
                %v989 = vld [vmem:[%s935 + $0xd0] sm:$0xff]
                %990 = vst [vmem:[%s936 + $0x190] sm:$0xff] %v989
                %v991 = vld [vmem:[%s935 + $0xd8] sm:$0xff]
                %992 = vst [vmem:[%s936 + $0x198] sm:$0xff] %v991
                %v993 = vld [vmem:[%s935 + $0xe0] sm:$0xff]
                %994 = vst [vmem:[%s936 + $0x1c0] sm:$0xff] %v993
                %v995 = vld [vmem:[%s935 + $0xe8] sm:$0xff]
                %996 = vst [vmem:[%s936 + $0x1c8] sm:$0xff] %v995
                %v997 = vld [vmem:[%s935 + $0xf0] sm:$0xff]
                %998 = vst [vmem:[%s936 + $0x1d0] sm:$0xff] %v997
                %v999 = vld [vmem:[%s935 + $0xf8] sm:$0xff]
                %1000 = vst [vmem:[%s936 + $0x1d8] sm:$0xff] %v999
                %v1001 = vld [vmem:[%s935 + $0x100] sm:$0xff]
                %1002 = vst [vmem:[%s936 + $0x200] sm:$0xff] %v1001
                %v1003 = vld [vmem:[%s935 + $0x108] sm:$0xff]
                %1004 = vst [vmem:[%s936 + $0x208] sm:$0xff] %v1003
                %v1005 = vld [vmem:[%s935 + $0x110] sm:$0xff]
                %1006 = vst [vmem:[%s936 + $0x210] sm:$0xff] %v1005
                %v1007 = vld [vmem:[%s935 + $0x118] sm:$0xff]
                %1008 = vst [vmem:[%s936 + $0x218] sm:$0xff] %v1007
                %v1009 = vld [vmem:[%s935 + $0x120] sm:$0xff]
                %1010 = vst [vmem:[%s936 + $0x240] sm:$0xff] %v1009
                %v1011 = vld [vmem:[%s935 + $0x128] sm:$0xff]
                %1012 = vst [vmem:[%s936 + $0x248] sm:$0xff] %v1011
                %v1013 = vld [vmem:[%s935 + $0x130] sm:$0xff]
                %1014 = vst [vmem:[%s936 + $0x250] sm:$0xff] %v1013
                %v1015 = vld [vmem:[%s935 + $0x138] sm:$0xff]
                %1016 = vst [vmem:[%s936 + $0x258] sm:$0xff] %v1015
                %v1017 = vld [vmem:[%s935 + $0x140] sm:$0xff]
                %1018 = vst [vmem:[%s936 + $0x280] sm:$0xff] %v1017
                %v1019 = vld [vmem:[%s935 + $0x148] sm:$0xff]
                %1020 = vst [vmem:[%s936 + $0x288] sm:$0xff] %v1019
                %v1021 = vld [vmem:[%s935 + $0x150] sm:$0xff]
                %1022 = vst [vmem:[%s936 + $0x290] sm:$0xff] %v1021
                %v1023 = vld [vmem:[%s935 + $0x158] sm:$0xff]
                %1024 = vst [vmem:[%s936 + $0x298] sm:$0xff] %v1023
                %v1025 = vld [vmem:[%s935 + $0x160] sm:$0xff]
                %1026 = vst [vmem:[%s936 + $0x2c0] sm:$0xff] %v1025
                %v1027 = vld [vmem:[%s935 + $0x168] sm:$0xff]
                %1028 = vst [vmem:[%s936 + $0x2c8] sm:$0xff] %v1027
                %v1029 = vld [vmem:[%s935 + $0x170] sm:$0xff]
                %1030 = vst [vmem:[%s936 + $0x2d0] sm:$0xff] %v1029
                %v1031 = vld [vmem:[%s935 + $0x178] sm:$0xff]
                %1032 = vst [vmem:[%s936 + $0x2d8] sm:$0xff] %v1031
                %v1033 = vld [vmem:[%s935 + $0x180] sm:$0xff]
                %1034 = vst [vmem:[%s936 + $0x300] sm:$0xff] %v1033
                %v1035 = vld [vmem:[%s935 + $0x188] sm:$0xff]
                %1036 = vst [vmem:[%s936 + $0x308] sm:$0xff] %v1035
                %v1037 = vld [vmem:[%s935 + $0x190] sm:$0xff]
                %1038 = vst [vmem:[%s936 + $0x310] sm:$0xff] %v1037
                %v1039 = vld [vmem:[%s935 + $0x198] sm:$0xff]
                %1040 = vst [vmem:[%s936 + $0x318] sm:$0xff] %v1039
                %v1041 = vld [vmem:[%s935 + $0x1a0] sm:$0xff]
                %1042 = vst [vmem:[%s936 + $0x340] sm:$0xff] %v1041
                %v1043 = vld [vmem:[%s935 + $0x1a8] sm:$0xff]
                %1044 = vst [vmem:[%s936 + $0x348] sm:$0xff] %v1043
                %v1045 = vld [vmem:[%s935 + $0x1b0] sm:$0xff]
                %1046 = vst [vmem:[%s936 + $0x350] sm:$0xff] %v1045
                %v1047 = vld [vmem:[%s935 + $0x1b8] sm:$0xff]
                %1048 = vst [vmem:[%s936 + $0x358] sm:$0xff] %v1047
                %v1049 = vld [vmem:[%s935 + $0x1c0] sm:$0xff]
                %1050 = vst [vmem:[%s936 + $0x380] sm:$0xff] %v1049
                %v1051 = vld [vmem:[%s935 + $0x1c8] sm:$0xff]
                %1052 = vst [vmem:[%s936 + $0x388] sm:$0xff] %v1051
                %v1053 = vld [vmem:[%s935 + $0x1d0] sm:$0xff]
                %1054 = vst [vmem:[%s936 + $0x390] sm:$0xff] %v1053
                %v1055 = vld [vmem:[%s935 + $0x1d8] sm:$0xff]
                %1056 = vst [vmem:[%s936 + $0x398] sm:$0xff] %v1055
                %v1057 = vld [vmem:[%s935 + $0x1e0] sm:$0xff]
                %1058 = vst [vmem:[%s936 + $0x3c0] sm:$0xff] %v1057
                %v1059 = vld [vmem:[%s935 + $0x1e8] sm:$0xff]
                %1060 = vst [vmem:[%s936 + $0x3c8] sm:$0xff] %v1059
                %v1061 = vld [vmem:[%s935 + $0x1f0] sm:$0xff]
                %1062 = vst [vmem:[%s936 + $0x3d0] sm:$0xff] %v1061
                %v1063 = vld [vmem:[%s935 + $0x1f8] sm:$0xff]
                %1064 = vst [vmem:[%s936 + $0x3d8] sm:$0xff] %v1063
              $region49: #{up_conv_forward.3} parent=43 // loop_footer
                %s934 = sadd.s32 1, %s930
              $region50: #{up_conv_forward.3} parent=43 // loop_footer_branch
                %929 = sbr.rel target = $region46
              $region51: #{up_conv_forward.3} parent=43 // loop_exit
                _
            $region44: #{up_conv_forward.3} parent=39 // pred_fallthru
              _
            // Predicated region
            $region52: #{up_conv_forward.3} parent=39 // pred_check
              _
            $region53: #{up_conv_forward.3} parent=39 // pred_check_branch
              %1066 = sbr.rel target = $region55
            $region54: #{up_conv_forward.3} parent=39 // pred_region
              _
            $region55: #{up_conv_forward.3} parent=39 // pred_fallthru
              _
          $region40: #{up_conv_forward.3} parent=35 // pred_fallthru
            _
          %1067 = vnop
        $region36: #{up_conv_forward.3} parent=31 // pred_fallthru
          _
      $region32: #{up_conv_forward.3} parent=5 // pred_fallthru
        _
      %p1068 = scmp.le.s32.totalorder 2, %s9
      // Predicated region
      $region56: #{up_conv_forward.3} parent=5 // pred_check
        %p1069 = pneg %p1068
      $region57: #{up_conv_forward.3} parent=5 // pred_check_branch
        %1071 = sbr.rel (%p1069) target = $region59
      $region58: #{up_conv_forward.3} parent=5 // pred_region
        %s1072 = ssub.s32 %s9, 2
        // Predicated region
        $region60: #{up_conv_forward.3} parent=58 // pred_check
          %p1073 = pneg %p106
        $region61: #{up_conv_forward.3} parent=58 // pred_check_branch
          %1075 = sbr.rel (%p1073) target = $region63
        $region62: #{up_conv_forward.3} parent=58 // pred_region
          %s1076 = sand.u32 %s91, 1
          %s1077 = sand.u32 %s91, 1
          %s1078 = smul.addr %s1077, 512
          %s1079 = scalar_lea.vmem [#allocation2], %s1078
        $region63: #{up_conv_forward.3} parent=58 // pred_fallthru
          _
      $region59: #{up_conv_forward.3} parent=5 // pred_fallthru
        _
    $region6: #{up_conv_forward.3} parent=1 // loop_footer
      %s13 = sadd.s32 1, %s9
    $region7: #{up_conv_forward.3} parent=1 // loop_footer_branch
      %8 = sbr.rel target = $region3
    $region8: #{up_conv_forward.3} parent=1 // loop_exit
      _

</llo_original>
